<compile_context>
chip_gen: v6e
topology: v6e:2x2x1
jax: 0.10.0
libtpu: 0.0.40
codegen_flags: <defaults>
</compile_context>

<pallas_src>
import functools
import math

import jax
import jax.numpy as jnp
from jax import lax
from jax.experimental import pallas as pl
from jax.experimental.pallas import tpu as pltpu


_GELU_C = math.sqrt(2.0 / math.pi)


def _layernorm(x, g, b, eps):
    mu = jnp.mean(x, axis=-1, keepdims=True)
    var = jnp.mean(jnp.square(x - mu), axis=-1, keepdims=True)
    return (x - mu) * lax.rsqrt(var + eps) * g + b


def _gelu_tanh(x):
    # 0.5 * x * (1 + tanh(sqrt(2/pi) * (x + 0.044715 * x^3)))  (module's GELU)
    return 0.5 * x * (1.0 + jnp.tanh(_GELU_C * (x + 0.044715 * x * x * x)))


def temporal_transformer_kernel(x_ref, pos_ref, g1_ref, b1_ref, wqkv_ref,
                                wo_ref, bo_ref, g2_ref, b2_ref,
                                wf1_ref, bf1_ref, wf2_ref, bf2_ref,
                                o_ref, xc_ref,
                                *, heads, dim_head, scale, project_out, eps):
    """Grid = (batch, depth); one batch element, one transformer layer per step.

    x_ref   : (n, d)        input tokens for this batch element (read at layer 0)
    pos_ref : (n, d)        positional embedding (added at layer 0)
    g1/b1   : (1, d)        LayerNorm 1 affine
    wqkv    : (d, 3*h*dh)   fused QKV projection (no bias)
    wo/bo   : (h*dh, d)/(1,d)  attention output projection
    g2/b2   : (1, d)        LayerNorm 2 affine
    wf1/bf1 : (d, mlp)/(1, mlp)   FFN layer 1
    wf2/bf2 : (mlp, d)/(1, d)     FFN layer 2
    o_ref   : (n, d)        final output (written at last layer)
    xc_ref  : (n, d) f32    VMEM scratch: running activation across layers
    """
    layer = pl.program_id(1)
    n, d = o_ref.shape
    inner = heads * dim_head

    @pl.when(layer == 0)
    def _():
        xc_ref[...] = (x_ref[...].astype(jnp.float32)
                       + pos_ref[...].astype(jnp.float32))

    x = xc_ref[...]                                     # (n, d) f32

    # ---- Residual(PreNorm(Attention)) ---------------------------------------
    h = _layernorm(x, g1_ref[...], b1_ref[...], eps)
    qkv = jnp.dot(h, wqkv_ref[...],
                  preferred_element_type=jnp.float32)   # (n, 3*inner)
    q = qkv[:, :inner]
    k = qkv[:, inner:2 * inner]
    v = qkv[:, 2 * inner:]

    proj = jnp.zeros((n, d), jnp.float32)
    for hh in range(heads):                             # heads is small & static
        lo, hi = hh * dim_head, (hh + 1) * dim_head
        qh, kh, vh = q[:, lo:hi], k[:, lo:hi], v[:, lo:hi]
        # dots = qh @ kh.T without materializing a transpose.
        dots = lax.dot_general(qh, kh, (((1,), (1,)), ((), ())),
                               preferred_element_type=jnp.float32) * scale
        dots = dots - jnp.max(dots, axis=-1, keepdims=True)
        e = jnp.exp(dots)
        p = e / jnp.sum(e, axis=-1, keepdims=True)
        oh = jnp.dot(p, vh, preferred_element_type=jnp.float32)  # (n, dh)
        if project_out:
            # Fuse the output projection: concat(out_h) @ Wo == sum_h out_h @ Wo[h]
            proj = proj + jnp.dot(oh, wo_ref[lo:hi, :],
                                  preferred_element_type=jnp.float32)
        else:
            proj = oh                                    # heads == 1, inner == d
    if project_out:
        proj = proj + bo_ref[...]
    x = x + proj

    # ---- Residual(PreNorm(FeedForward)) -------------------------------------
    h2 = _layernorm(x, g2_ref[...], b2_ref[...], eps)
    f = jnp.dot(h2, wf1_ref[...], preferred_element_type=jnp.float32) + bf1_ref[...]
    f = _gelu_tanh(f)
    f = jnp.dot(f, wf2_ref[...], preferred_element_type=jnp.float32) + bf2_ref[...]
    x = x + f
    # TODO(synk): dropout layers are identity here (module constructs dropout=0.0).

    xc_ref[...] = x

    @pl.when(layer == pl.num_programs(1) - 1)
    def _():
        o_ref[...] = xc_ref[...].astype(o_ref.dtype)


def temporal_transformer_all(x, pos_embedding, layer_params, *, heads, dim_head,
                             eps=1e-5):
    """Pallas implementation of Temporal_Transformer_All.forward.

    x            : any shape reshapeable to (-1, num_patches, input_dim), f32
    pos_embedding: (1, num_patches, input_dim)
    layer_params : list (len = depth) of dicts with torch-layout weights:
        ln1_g, ln1_b (d,), w_qkv (3*h*dh, d), w_out (d, h*dh), b_out (d,),
        ln2_g, ln2_b (d,), w_ff1 (mlp, d), b_ff1 (mlp,), w_ff2 (d, mlp), b_ff2 (d,)
    """
    num_patches = pos_embedding.shape[1]
    d = pos_embedding.shape[2]
    x = x.reshape(-1, num_patches, d)
    B, n, _ = x.shape
    depth = len(layer_params)
    inner = heads * dim_head
    project_out = not (heads == 1 and dim_head == d)
    scale = dim_head ** (-0.5)
    mlp_dim = layer_params[0]["w_ff1"].shape[0]

    # --- stack per-layer params along a leading depth axis (matmul layout) ---
    g1_all = jnp.stack([p["ln1_g"].reshape(1, d) for p in layer_params])
    b1_all = jnp.stack([p["ln1_b"].reshape(1, d) for p in layer_params])
    wqkv_all = jnp.stack([p["w_qkv"].T for p in layer_params])        # (depth, d, 3*inner)
    if project_out:
        wo_all = jnp.stack([p["w_out"].T for p in layer_params])      # (depth, inner, d)
        bo_all = jnp.stack([p["b_out"].reshape(1, d) for p in layer_params])
    else:
        wo_all = jnp.zeros((depth, inner, d), jnp.float32)            # unused dummies
        bo_all = jnp.zeros((depth, 1, d), jnp.float32)
    g2_all = jnp.stack([p["ln2_g"].reshape(1, d) for p in layer_params])
    b2_all = jnp.stack([p["ln2_b"].reshape(1, d) for p in layer_params])
    wf1_all = jnp.stack([p["w_ff1"].T for p in layer_params])         # (depth, d, mlp)
    bf1_all = jnp.stack([p["b_ff1"].reshape(1, mlp_dim) for p in layer_params])
    wf2_all = jnp.stack([p["w_ff2"].T for p in layer_params])         # (depth, mlp, d)
    bf2_all = jnp.stack([p["b_ff2"].reshape(1, d) for p in layer_params])

    kernel = functools.partial(temporal_transformer_kernel, heads=heads,
                               dim_head=dim_head, scale=scale,
                               project_out=project_out, eps=eps)

    return pl.pallas_call(
        kernel,
        out_shape=jax.ShapeDtypeStruct((B, n, d), x.dtype),
        grid_spec=pltpu.PrefetchScalarGridSpec(
            num_scalar_prefetch=0,
            grid=(B, depth),
            in_specs=[
                pl.BlockSpec((None, n, d), lambda b, l: (b, 0, 0)),          # x
                pl.BlockSpec((None, n, d), lambda b, l: (0, 0, 0)),          # pos
                pl.BlockSpec((None, 1, d), lambda b, l: (l, 0, 0)),          # ln1 gamma
                pl.BlockSpec((None, 1, d), lambda b, l: (l, 0, 0)),          # ln1 beta
                pl.BlockSpec((None, d, 3 * inner), lambda b, l: (l, 0, 0)),  # w_qkv
                pl.BlockSpec((None, inner, d), lambda b, l: (l, 0, 0)),      # w_out
                pl.BlockSpec((None, 1, d), lambda b, l: (l, 0, 0)),          # b_out
                pl.BlockSpec((None, 1, d), lambda b, l: (l, 0, 0)),          # ln2 gamma
                pl.BlockSpec((None, 1, d), lambda b, l: (l, 0, 0)),          # ln2 beta
                pl.BlockSpec((None, d, mlp_dim), lambda b, l: (l, 0, 0)),    # w_ff1
                pl.BlockSpec((None, 1, mlp_dim), lambda b, l: (l, 0, 0)),    # b_ff1
                pl.BlockSpec((None, mlp_dim, d), lambda b, l: (l, 0, 0)),    # w_ff2
                pl.BlockSpec((None, 1, d), lambda b, l: (l, 0, 0)),          # b_ff2
            ],
            out_specs=pl.BlockSpec((None, n, d), lambda b, l: (b, 0, 0)),
            scratch_shapes=[pltpu.VMEM((n, d), jnp.float32)],
        ),
        compiler_params=pltpu.CompilerParams(
            dimension_semantics=("parallel", "arbitrary"),
            vmem_limit_bytes=48 * 1024 * 1024),
    )(x, pos_embedding, g1_all, b1_all, wqkv_all, wo_all, bo_all,
      g2_all, b2_all, wf1_all, bf1_all, wf2_all, bf2_all)


# ------------------------- pure-JAX reference (for verification) -------------
def temporal_transformer_all_ref(x, pos_embedding, layer_params, *, heads,
                                 dim_head, eps=1e-5):
    n = pos_embedding.shape[1]
    d = pos_embedding.shape[2]
    x = x.reshape(-1, n, d)
    x = x + pos_embedding[:, :n]
    inner = heads * dim_head
    project_out = not (heads == 1 and dim_head == d)
    scale = dim_head ** (-0.5)

    for p in layer_params:
        h = _layernorm(x, p["ln1_g"], p["ln1_b"], eps)
        qkv = h @ p["w_qkv"].T
        q, k, v = jnp.split(qkv, 3, axis=-1)

        def split_heads(t):
            b, nn, _ = t.shape
            return t.reshape(b, nn, heads, dim_head).transpose(0, 2, 1, 3)

        q, k, v = map(split_heads, (q, k, v))
        dots = jnp.einsum('bhid,bhjd->bhij', q, k) * scale
        attn = jax.nn.softmax(dots, axis=-1)
        o = jnp.einsum('bhij,bhjd->bhid', attn, v)
        o = o.transpose(0, 2, 1, 3).reshape(x.shape[0], n, inner)
        if project_out:
            o = o @ p["w_out"].T + p["b_out"]
        x = x + o

        h2 = _layernorm(x, p["ln2_g"], p["ln2_b"], eps)
        f = h2 @ p["w_ff1"].T + p["b_ff1"]
        f = _gelu_tanh(f)
        f = f @ p["w_ff2"].T + p["b_ff2"]
        x = x + f
    return x


if __name__ == "__main__":
    # Small deterministic example consistent with the module:
    # Temporal_Transformer_All(num_patches=16, input_dim=32, depth=2, heads=4,
    #                          mlp_dim=64, dim_head=8) on x of shape (2, 16, 32).
    B = 2
    num_patches = 16
    input_dim = 32
    depth = 2
    heads = 4
    dim_head = 8
    mlp_dim = 64
    inner = heads * dim_head

    keys = iter(jax.random.split(jax.random.PRNGKey(0), 64))

    def rnd(shape, s=1.0):
        return jax.random.normal(next(keys), shape, jnp.float32) * s

    x = rnd((B, num_patches, input_dim))
    pos = rnd((1, num_patches, input_dim))

    layer_params = []
    for _ in range(depth):
        layer_params.append(dict(
            ln1_g=1.0 + rnd((input_dim,), 0.1),
            ln1_b=rnd((input_dim,), 0.1),
            w_qkv=rnd((3 * inner, input_dim), 0.2),   # torch Linear layout (out, in)
            w_out=rnd((input_dim, inner), 0.2),
            b_out=rnd((input_dim,), 0.1),
            ln2_g=1.0 + rnd((input_dim,), 0.1),
            ln2_b=rnd((input_dim,), 0.1),
            w_ff1=rnd((mlp_dim, input_dim), 0.2),
            b_ff1=rnd((mlp_dim,), 0.1),
            w_ff2=rnd((input_dim, mlp_dim), 0.2),
            b_ff2=rnd((input_dim,), 0.1),
        ))

    out = temporal_transformer_all(x, pos, layer_params,
                                   heads=heads, dim_head=dim_head)
    out = jax.block_until_ready(out)

    ref = temporal_transformer_all_ref(x, pos, layer_params,
                                       heads=heads, dim_head=dim_head)

    assert out.shape == (B, num_patches, input_dim), out.shape
    max_err = float(jnp.max(jnp.abs(out - ref)))
    assert jnp.allclose(out, ref, atol=2e-4, rtol=2e-4), \
        f"max abs err = {max_err}"
    print("KERNEL_OK")
</pallas_src>

<mosaic_0001>
module attributes {stable_mosaic.version = 11 : i64} {
  func.func @temporal_transformer_kernel(%arg0: i32, %arg1: i32, %arg2: memref<1x16x32xf32, #tpu.memory_space<vmem>>, %arg3: memref<1x16x32xf32, #tpu.memory_space<vmem>>, %arg4: memref<1x1x32xf32, #tpu.memory_space<vmem>>, %arg5: memref<1x1x32xf32, #tpu.memory_space<vmem>>, %arg6: memref<1x32x96xf32, #tpu.memory_space<vmem>>, %arg7: memref<1x32x32xf32, #tpu.memory_space<vmem>>, %arg8: memref<1x1x32xf32, #tpu.memory_space<vmem>>, %arg9: memref<1x1x32xf32, #tpu.memory_space<vmem>>, %arg10: memref<1x1x32xf32, #tpu.memory_space<vmem>>, %arg11: memref<1x32x64xf32, #tpu.memory_space<vmem>>, %arg12: memref<1x1x64xf32, #tpu.memory_space<vmem>>, %arg13: memref<1x64x32xf32, #tpu.memory_space<vmem>>, %arg14: memref<1x1x32xf32, #tpu.memory_space<vmem>>, %arg15: memref<1x16x32xf32, #tpu.memory_space<vmem>>, %arg16: memref<16x32xf32, #tpu.memory_space<vmem>>) attributes {dimension_semantics = [#tpu.dimension_semantics<parallel>, #tpu.dimension_semantics<arbitrary>], iteration_bounds = array<i64: 2, 2>, scalar_prefetch = 0 : i64, scratch_operands = 1 : i64, tpu.core_type = #tpu.core_type<tc>, window_params = [{transform_indices = @transform_0, window_bounds = array<i64: 1, 16, 32>}, {pipeline_mode = #tpu.pipeline_mode<synchronous>, transform_indices = @transform_1, window_bounds = array<i64: 1, 16, 32>}, {transform_indices = @transform_2, window_bounds = array<i64: 1, 1, 32>}, {transform_indices = @transform_3, window_bounds = array<i64: 1, 1, 32>}, {transform_indices = @transform_4, window_bounds = array<i64: 1, 32, 96>}, {transform_indices = @transform_5, window_bounds = array<i64: 1, 32, 32>}, {transform_indices = @transform_6, window_bounds = array<i64: 1, 1, 32>}, {transform_indices = @transform_7, window_bounds = array<i64: 1, 1, 32>}, {transform_indices = @transform_8, window_bounds = array<i64: 1, 1, 32>}, {transform_indices = @transform_9, window_bounds = array<i64: 1, 32, 64>}, {transform_indices = @transform_10, window_bounds = array<i64: 1, 1, 64>}, {transform_indices = @transform_11, window_bounds = array<i64: 1, 64, 32>}, {transform_indices = @transform_12, window_bounds = array<i64: 1, 1, 32>}, {transform_indices = @transform_13, window_bounds = array<i64: 1, 16, 32>}]} {
    %c0_i32 = arith.constant 0 : i32
    %0 = arith.cmpi eq, %arg1, %c0_i32 : i32
    %1 = arith.extui %0 : i1 to i32
    %c0_i32_0 = arith.constant 0 : i32
    %2 = arith.cmpi ne, %1, %c0_i32_0 : i32
    scf.if %2 {
      %c0_85 = arith.constant 0 : index
      %c0_86 = arith.constant 0 : index
      %c0_87 = arith.constant 0 : index
      %180 = vector.load %arg2[%c0_85, %c0_86, %c0_87] : memref<1x16x32xf32, #tpu.memory_space<vmem>>, vector<1x16x32xf32>
      %181 = vector.shape_cast %180 : vector<1x16x32xf32> to vector<16x32xf32>
      %c0_88 = arith.constant 0 : index
      %c0_89 = arith.constant 0 : index
      %c0_90 = arith.constant 0 : index
      %182 = vector.load %arg3[%c0_88, %c0_89, %c0_90] : memref<1x16x32xf32, #tpu.memory_space<vmem>>, vector<1x16x32xf32>
      %183 = vector.shape_cast %182 : vector<1x16x32xf32> to vector<16x32xf32>
      %184 = arith.addf %181, %183 : vector<16x32xf32>
      %c0_91 = arith.constant 0 : index
      %c0_92 = arith.constant 0 : index
      %185 = vector.load %arg16[%c0_91, %c0_92] : memref<16x32xf32, #tpu.memory_space<vmem>>, vector<16x32xf32>
      tpu.vector_store %arg16[%c0_91, %c0_92], %184 {strides = array<i32>} : memref<16x32xf32, #tpu.memory_space<vmem>>, vector<16x32xf32>,
    } else {
    }
    %c0 = arith.constant 0 : index
    %c0_1 = arith.constant 0 : index
    %3 = vector.load %arg16[%c0, %c0_1] : memref<16x32xf32, #tpu.memory_space<vmem>>, vector<16x32xf32>
    %c0_2 = arith.constant 0 : index
    %c0_3 = arith.constant 0 : index
    %c0_4 = arith.constant 0 : index
    %4 = vector.load %arg4[%c0_2, %c0_3, %c0_4] : memref<1x1x32xf32, #tpu.memory_space<vmem>>, vector<1x1x32xf32>
    %5 = vector.shape_cast %4 : vector<1x1x32xf32> to vector<1x32xf32>
    %c0_5 = arith.constant 0 : index
    %c0_6 = arith.constant 0 : index
    %c0_7 = arith.constant 0 : index
    %6 = vector.load %arg5[%c0_5, %c0_6, %c0_7] : memref<1x1x32xf32, #tpu.memory_space<vmem>>, vector<1x1x32xf32>
    %7 = vector.shape_cast %6 : vector<1x1x32xf32> to vector<1x32xf32>
    %cst = arith.constant dense<0.000000e+00> : vector<16xf32>
    %8 = vector.multi_reduction <add>, %3, %cst [1] : vector<16x32xf32> to vector<16xf32>
    %9 = vector.shape_cast %8 : vector<16xf32> to vector<16x1xf32>
    %cst_8 = arith.constant 3.200000e+01 : f32
    %10 = vector.broadcast %cst_8 : f32 to vector<16x1xf32>
    %11 = arith.divf %9, %10 : vector<16x1xf32>
    %12 = vector.broadcast %11 : vector<16x1xf32> to vector<16x32xf32>
    %13 = arith.subf %3, %12 : vector<16x32xf32>
    %14 = arith.mulf %13, %13 : vector<16x32xf32>
    %cst_9 = arith.constant dense<0.000000e+00> : vector<16xf32>
    %15 = vector.multi_reduction <add>, %14, %cst_9 [1] : vector<16x32xf32> to vector<16xf32>
    %16 = vector.shape_cast %15 : vector<16xf32> to vector<16x1xf32>
    %cst_10 = arith.constant 3.200000e+01 : f32
    %17 = vector.broadcast %cst_10 : f32 to vector<16x1xf32>
    %18 = arith.divf %16, %17 : vector<16x1xf32>
    %19 = vector.broadcast %11 : vector<16x1xf32> to vector<16x32xf32>
    %20 = arith.subf %3, %19 : vector<16x32xf32>
    %cst_11 = arith.constant 9.99999974E-6 : f32
    %21 = vector.broadcast %cst_11 : f32 to vector<16x1xf32>
    %22 = arith.addf %18, %21 : vector<16x1xf32>
    %23 = math.rsqrt %22 : vector<16x1xf32>
    %24 = vector.broadcast %23 : vector<16x1xf32> to vector<16x32xf32>
    %25 = arith.mulf %20, %24 : vector<16x32xf32>
    %26 = vector.broadcast %5 : vector<1x32xf32> to vector<16x32xf32>
    %27 = arith.mulf %25, %26 : vector<16x32xf32>
    %28 = vector.broadcast %7 : vector<1x32xf32> to vector<16x32xf32>
    %29 = arith.addf %27, %28 : vector<16x32xf32>
    %c0_12 = arith.constant 0 : index
    %c0_13 = arith.constant 0 : index
    %c0_14 = arith.constant 0 : index
    %30 = vector.load %arg6[%c0_12, %c0_13, %c0_14] : memref<1x32x96xf32, #tpu.memory_space<vmem>>, vector<1x32x96xf32>
    %31 = vector.shape_cast %30 : vector<1x32x96xf32> to vector<32x96xf32>
    %cst_15 = arith.constant dense<0.000000e+00> : vector<16x96xf32>
    %32 = tpu.matmul %29, %31, %cst_15 {dimension_numbers = #tpu.dot_dimension_numbers<[1], [0], [0], [1], [0, 0, 1, 1], [], []>} : vector<16x32xf32>, vector<32x96xf32>, vector<16x96xf32> -> vector<16x96xf32>
    %33 = vector.extract_strided_slice %32 {offsets = [0, 0], sizes = [16, 32], strides = [1, 1]} : vector<16x96xf32> to vector<16x32xf32>
    %34 = vector.extract_strided_slice %32 {offsets = [0, 32], sizes = [16, 32], strides = [1, 1]} : vector<16x96xf32> to vector<16x32xf32>
    %35 = vector.extract_strided_slice %32 {offsets = [0, 64], sizes = [16, 32], strides = [1, 1]} : vector<16x96xf32> to vector<16x32xf32>
    %cst_16 = arith.constant 0.000000e+00 : f32
    %36 = vector.broadcast %cst_16 : f32 to vector<16x32xf32>
    %37 = vector.extract_strided_slice %33 {offsets = [0, 0], sizes = [16, 8], strides = [1, 1]} : vector<16x32xf32> to vector<16x8xf32>
    %38 = vector.extract_strided_slice %34 {offsets = [0, 0], sizes = [16, 8], strides = [1, 1]} : vector<16x32xf32> to vector<16x8xf32>
    %39 = vector.extract_strided_slice %35 {offsets = [0, 0], sizes = [16, 8], strides = [1, 1]} : vector<16x32xf32> to vector<16x8xf32>
    %cst_17 = arith.constant dense<0.000000e+00> : vector<16x16xf32>
    %40 = tpu.matmul %37, %38, %cst_17 {dimension_numbers = #tpu.dot_dimension_numbers<[1], [1], [0], [0], [0, 0, 1, 0], [], []>} : vector<16x8xf32>, vector<16x8xf32>, vector<16x16xf32> -> vector<16x16xf32>
    %cst_18 = arith.constant 0.353553385 : f32
    %41 = vector.broadcast %cst_18 : f32 to vector<16x16xf32>
    %42 = arith.mulf %40, %41 : vector<16x16xf32>
    %cst_19 = arith.constant dense<0xFF800000> : vector<16xf32>
    %43 = vector.multi_reduction <maximumf>, %42, %cst_19 [1] : vector<16x16xf32> to vector<16xf32>
    %44 = vector.shape_cast %43 : vector<16xf32> to vector<16x1xf32>
    %45 = vector.broadcast %44 : vector<16x1xf32> to vector<16x16xf32>
    %46 = arith.subf %42, %45 : vector<16x16xf32>
    %47 = math.exp %46 : vector<16x16xf32>
    %cst_20 = arith.constant dense<0.000000e+00> : vector<16xf32>
    %48 = vector.multi_reduction <add>, %47, %cst_20 [1] : vector<16x16xf32> to vector<16xf32>
    %49 = vector.shape_cast %48 : vector<16xf32> to vector<16x1xf32>
    %50 = vector.broadcast %49 : vector<16x1xf32> to vector<16x16xf32>
    %51 = arith.divf %47, %50 : vector<16x16xf32>
    %cst_21 = arith.constant dense<0.000000e+00> : vector<16x8xf32>
    %52 = tpu.matmul %51, %39, %cst_21 {dimension_numbers = #tpu.dot_dimension_numbers<[1], [0], [0], [1], [0, 0, 1, 1], [], []>} : vector<16x16xf32>, vector<16x8xf32>, vector<16x8xf32> -> vector<16x8xf32>
    %c0_22 = arith.constant 0 : index
    %c0_23 = arith.constant 0 : index
    %c0_24 = arith.constant 0 : index
    %53 = vector.load %arg7[%c0_22, %c0_23, %c0_24] : memref<1x32x32xf32, #tpu.memory_space<vmem>>, vector<1x8x32xf32>
    %54 = vector.shape_cast %53 : vector<1x8x32xf32> to vector<8x32xf32>
    %cst_25 = arith.constant dense<0.000000e+00> : vector<16x32xf32>
    %55 = tpu.matmul %52, %54, %cst_25 {dimension_numbers = #tpu.dot_dimension_numbers<[1], [0], [0], [1], [0, 0, 1, 1], [], []>} : vector<16x8xf32>, vector<8x32xf32>, vector<16x32xf32> -> vector<16x32xf32>
    %56 = arith.addf %36, %55 : vector<16x32xf32>
    %57 = vector.extract_strided_slice %33 {offsets = [0, 8], sizes = [16, 8], strides = [1, 1]} : vector<16x32xf32> to vector<16x8xf32>
    %58 = vector.extract_strided_slice %34 {offsets = [0, 8], sizes = [16, 8], strides = [1, 1]} : vector<16x32xf32> to vector<16x8xf32>
    %59 = vector.extract_strided_slice %35 {offsets = [0, 8], sizes = [16, 8], strides = [1, 1]} : vector<16x32xf32> to vector<16x8xf32>
    %cst_26 = arith.constant dense<0.000000e+00> : vector<16x16xf32>
    %60 = tpu.matmul %57, %58, %cst_26 {dimension_numbers = #tpu.dot_dimension_numbers<[1], [1], [0], [0], [0, 0, 1, 0], [], []>} : vector<16x8xf32>, vector<16x8xf32>, vector<16x16xf32> -> vector<16x16xf32>
    %cst_27 = arith.constant 0.353553385 : f32
    %61 = vector.broadcast %cst_27 : f32 to vector<16x16xf32>
    %62 = arith.mulf %60, %61 : vector<16x16xf32>
    %cst_28 = arith.constant dense<0xFF800000> : vector<16xf32>
    %63 = vector.multi_reduction <maximumf>, %62, %cst_28 [1] : vector<16x16xf32> to vector<16xf32>
    %64 = vector.shape_cast %63 : vector<16xf32> to vector<16x1xf32>
    %65 = vector.broadcast %64 : vector<16x1xf32> to vector<16x16xf32>
    %66 = arith.subf %62, %65 : vector<16x16xf32>
    %67 = math.exp %66 : vector<16x16xf32>
    %cst_29 = arith.constant dense<0.000000e+00> : vector<16xf32>
    %68 = vector.multi_reduction <add>, %67, %cst_29 [1] : vector<16x16xf32> to vector<16xf32>
    %69 = vector.shape_cast %68 : vector<16xf32> to vector<16x1xf32>
    %70 = vector.broadcast %69 : vector<16x1xf32> to vector<16x16xf32>
    %71 = arith.divf %67, %70 : vector<16x16xf32>
    %cst_30 = arith.constant dense<0.000000e+00> : vector<16x8xf32>
    %72 = tpu.matmul %71, %59, %cst_30 {dimension_numbers = #tpu.dot_dimension_numbers<[1], [0], [0], [1], [0, 0, 1, 1], [], []>} : vector<16x16xf32>, vector<16x8xf32>, vector<16x8xf32> -> vector<16x8xf32>
    %c0_31 = arith.constant 0 : index
    %c8 = arith.constant 8 : index
    %c0_32 = arith.constant 0 : index
    %73 = vector.load %arg7[%c0_31, %c8, %c0_32] : memref<1x32x32xf32, #tpu.memory_space<vmem>>, vector<1x8x32xf32>
    %74 = vector.shape_cast %73 : vector<1x8x32xf32> to vector<8x32xf32>
    %cst_33 = arith.constant dense<0.000000e+00> : vector<16x32xf32>
    %75 = tpu.matmul %72, %74, %cst_33 {dimension_numbers = #tpu.dot_dimension_numbers<[1], [0], [0], [1], [0, 0, 1, 1], [], []>} : vector<16x8xf32>, vector<8x32xf32>, vector<16x32xf32> -> vector<16x32xf32>
    %76 = arith.addf %56, %75 : vector<16x32xf32>
    %77 = vector.extract_strided_slice %33 {offsets = [0, 16], sizes = [16, 8], strides = [1, 1]} : vector<16x32xf32> to vector<16x8xf32>
    %78 = vector.extract_strided_slice %34 {offsets = [0, 16], sizes = [16, 8], strides = [1, 1]} : vector<16x32xf32> to vector<16x8xf32>
    %79 = vector.extract_strided_slice %35 {offsets = [0, 16], sizes = [16, 8], strides = [1, 1]} : vector<16x32xf32> to vector<16x8xf32>
    %cst_34 = arith.constant dense<0.000000e+00> : vector<16x16xf32>
    %80 = tpu.matmul %77, %78, %cst_34 {dimension_numbers = #tpu.dot_dimension_numbers<[1], [1], [0], [0], [0, 0, 1, 0], [], []>} : vector<16x8xf32>, vector<16x8xf32>, vector<16x16xf32> -> vector<16x16xf32>
    %cst_35 = arith.constant 0.353553385 : f32
    %81 = vector.broadcast %cst_35 : f32 to vector<16x16xf32>
    %82 = arith.mulf %80, %81 : vector<16x16xf32>
    %cst_36 = arith.constant dense<0xFF800000> : vector<16xf32>
    %83 = vector.multi_reduction <maximumf>, %82, %cst_36 [1] : vector<16x16xf32> to vector<16xf32>
    %84 = vector.shape_cast %83 : vector<16xf32> to vector<16x1xf32>
    %85 = vector.broadcast %84 : vector<16x1xf32> to vector<16x16xf32>
    %86 = arith.subf %82, %85 : vector<16x16xf32>
    %87 = math.exp %86 : vector<16x16xf32>
    %cst_37 = arith.constant dense<0.000000e+00> : vector<16xf32>
    %88 = vector.multi_reduction <add>, %87, %cst_37 [1] : vector<16x16xf32> to vector<16xf32>
    %89 = vector.shape_cast %88 : vector<16xf32> to vector<16x1xf32>
    %90 = vector.broadcast %89 : vector<16x1xf32> to vector<16x16xf32>
    %91 = arith.divf %87, %90 : vector<16x16xf32>
    %cst_38 = arith.constant dense<0.000000e+00> : vector<16x8xf32>
    %92 = tpu.matmul %91, %79, %cst_38 {dimension_numbers = #tpu.dot_dimension_numbers<[1], [0], [0], [1], [0, 0, 1, 1], [], []>} : vector<16x16xf32>, vector<16x8xf32>, vector<16x8xf32> -> vector<16x8xf32>
    %c0_39 = arith.constant 0 : index
    %c16 = arith.constant 16 : index
    %c0_40 = arith.constant 0 : index
    %93 = vector.load %arg7[%c0_39, %c16, %c0_40] : memref<1x32x32xf32, #tpu.memory_space<vmem>>, vector<1x8x32xf32>
    %94 = vector.shape_cast %93 : vector<1x8x32xf32> to vector<8x32xf32>
    %cst_41 = arith.constant dense<0.000000e+00> : vector<16x32xf32>
    %95 = tpu.matmul %92, %94, %cst_41 {dimension_numbers = #tpu.dot_dimension_numbers<[1], [0], [0], [1], [0, 0, 1, 1], [], []>} : vector<16x8xf32>, vector<8x32xf32>, vector<16x32xf32> -> vector<16x32xf32>
    %96 = arith.addf %76, %95 : vector<16x32xf32>
    %97 = vector.extract_strided_slice %33 {offsets = [0, 24], sizes = [16, 8], strides = [1, 1]} : vector<16x32xf32> to vector<16x8xf32>
    %98 = vector.extract_strided_slice %34 {offsets = [0, 24], sizes = [16, 8], strides = [1, 1]} : vector<16x32xf32> to vector<16x8xf32>
    %99 = vector.extract_strided_slice %35 {offsets = [0, 24], sizes = [16, 8], strides = [1, 1]} : vector<16x32xf32> to vector<16x8xf32>
    %cst_42 = arith.constant dense<0.000000e+00> : vector<16x16xf32>
    %100 = tpu.matmul %97, %98, %cst_42 {dimension_numbers = #tpu.dot_dimension_numbers<[1], [1], [0], [0], [0, 0, 1, 0], [], []>} : vector<16x8xf32>, vector<16x8xf32>, vector<16x16xf32> -> vector<16x16xf32>
    %cst_43 = arith.constant 0.353553385 : f32
    %101 = vector.broadcast %cst_43 : f32 to vector<16x16xf32>
    %102 = arith.mulf %100, %101 : vector<16x16xf32>
    %cst_44 = arith.constant dense<0xFF800000> : vector<16xf32>
    %103 = vector.multi_reduction <maximumf>, %102, %cst_44 [1] : vector<16x16xf32> to vector<16xf32>
    %104 = vector.shape_cast %103 : vector<16xf32> to vector<16x1xf32>
    %105 = vector.broadcast %104 : vector<16x1xf32> to vector<16x16xf32>
    %106 = arith.subf %102, %105 : vector<16x16xf32>
    %107 = math.exp %106 : vector<16x16xf32>
    %cst_45 = arith.constant dense<0.000000e+00> : vector<16xf32>
    %108 = vector.multi_reduction <add>, %107, %cst_45 [1] : vector<16x16xf32> to vector<16xf32>
    %109 = vector.shape_cast %108 : vector<16xf32> to vector<16x1xf32>
    %110 = vector.broadcast %109 : vector<16x1xf32> to vector<16x16xf32>
    %111 = arith.divf %107, %110 : vector<16x16xf32>
    %cst_46 = arith.constant dense<0.000000e+00> : vector<16x8xf32>
    %112 = tpu.matmul %111, %99, %cst_46 {dimension_numbers = #tpu.dot_dimension_numbers<[1], [0], [0], [1], [0, 0, 1, 1], [], []>} : vector<16x16xf32>, vector<16x8xf32>, vector<16x8xf32> -> vector<16x8xf32>
    %c0_47 = arith.constant 0 : index
    %c24 = arith.constant 24 : index
    %c0_48 = arith.constant 0 : index
    %113 = vector.load %arg7[%c0_47, %c24, %c0_48] : memref<1x32x32xf32, #tpu.memory_space<vmem>>, vector<1x8x32xf32>
    %114 = vector.shape_cast %113 : vector<1x8x32xf32> to vector<8x32xf32>
    %cst_49 = arith.constant dense<0.000000e+00> : vector<16x32xf32>
    %115 = tpu.matmul %112, %114, %cst_49 {dimension_numbers = #tpu.dot_dimension_numbers<[1], [0], [0], [1], [0, 0, 1, 1], [], []>} : vector<16x8xf32>, vector<8x32xf32>, vector<16x32xf32> -> vector<16x32xf32>
    %116 = arith.addf %96, %115 : vector<16x32xf32>
    %c0_50 = arith.constant 0 : index
    %c0_51 = arith.constant 0 : index
    %c0_52 = arith.constant 0 : index
    %117 = vector.load %arg8[%c0_50, %c0_51, %c0_52] : memref<1x1x32xf32, #tpu.memory_space<vmem>>, vector<1x1x32xf32>
    %118 = vector.shape_cast %117 : vector<1x1x32xf32> to vector<1x32xf32>
    %119 = vector.broadcast %118 : vector<1x32xf32> to vector<16x32xf32>
    %120 = arith.addf %116, %119 : vector<16x32xf32>
    %121 = arith.addf %3, %120 : vector<16x32xf32>
    %c0_53 = arith.constant 0 : index
    %c0_54 = arith.constant 0 : index
    %c0_55 = arith.constant 0 : index
    %122 = vector.load %arg9[%c0_53, %c0_54, %c0_55] : memref<1x1x32xf32, #tpu.memory_space<vmem>>, vector<1x1x32xf32>
    %123 = vector.shape_cast %122 : vector<1x1x32xf32> to vector<1x32xf32>
    %c0_56 = arith.constant 0 : index
    %c0_57 = arith.constant 0 : index
    %c0_58 = arith.constant 0 : index
    %124 = vector.load %arg10[%c0_56, %c0_57, %c0_58] : memref<1x1x32xf32, #tpu.memory_space<vmem>>, vector<1x1x32xf32>
    %125 = vector.shape_cast %124 : vector<1x1x32xf32> to vector<1x32xf32>
    %cst_59 = arith.constant dense<0.000000e+00> : vector<16xf32>
    %126 = vector.multi_reduction <add>, %121, %cst_59 [1] : vector<16x32xf32> to vector<16xf32>
    %127 = vector.shape_cast %126 : vector<16xf32> to vector<16x1xf32>
    %cst_60 = arith.constant 3.200000e+01 : f32
    %128 = vector.broadcast %cst_60 : f32 to vector<16x1xf32>
    %129 = arith.divf %127, %128 : vector<16x1xf32>
    %130 = vector.broadcast %129 : vector<16x1xf32> to vector<16x32xf32>
    %131 = arith.subf %121, %130 : vector<16x32xf32>
    %132 = arith.mulf %131, %131 : vector<16x32xf32>
    %cst_61 = arith.constant dense<0.000000e+00> : vector<16xf32>
    %133 = vector.multi_reduction <add>, %132, %cst_61 [1] : vector<16x32xf32> to vector<16xf32>
    %134 = vector.shape_cast %133 : vector<16xf32> to vector<16x1xf32>
    %cst_62 = arith.constant 3.200000e+01 : f32
    %135 = vector.broadcast %cst_62 : f32 to vector<16x1xf32>
    %136 = arith.divf %134, %135 : vector<16x1xf32>
    %137 = vector.broadcast %129 : vector<16x1xf32> to vector<16x32xf32>
    %138 = arith.subf %121, %137 : vector<16x32xf32>
    %cst_63 = arith.constant 9.99999974E-6 : f32
    %139 = vector.broadcast %cst_63 : f32 to vector<16x1xf32>
    %140 = arith.addf %136, %139 : vector<16x1xf32>
    %141 = math.rsqrt %140 : vector<16x1xf32>
    %142 = vector.broadcast %141 : vector<16x1xf32> to vector<16x32xf32>
    %143 = arith.mulf %138, %142 : vector<16x32xf32>
    %144 = vector.broadcast %123 : vector<1x32xf32> to vector<16x32xf32>
    %145 = arith.mulf %143, %144 : vector<16x32xf32>
    %146 = vector.broadcast %125 : vector<1x32xf32> to vector<16x32xf32>
    %147 = arith.addf %145, %146 : vector<16x32xf32>
    %c0_64 = arith.constant 0 : index
    %c0_65 = arith.constant 0 : index
    %c0_66 = arith.constant 0 : index
    %148 = vector.load %arg11[%c0_64, %c0_65, %c0_66] : memref<1x32x64xf32, #tpu.memory_space<vmem>>, vector<1x32x64xf32>
    %149 = vector.shape_cast %148 : vector<1x32x64xf32> to vector<32x64xf32>
    %cst_67 = arith.constant dense<0.000000e+00> : vector<16x64xf32>
    %150 = tpu.matmul %147, %149, %cst_67 {dimension_numbers = #tpu.dot_dimension_numbers<[1], [0], [0], [1], [0, 0, 1, 1], [], []>} : vector<16x32xf32>, vector<32x64xf32>, vector<16x64xf32> -> vector<16x64xf32>
    %c0_68 = arith.constant 0 : index
    %c0_69 = arith.constant 0 : index
    %c0_70 = arith.constant 0 : index
    %151 = vector.load %arg12[%c0_68, %c0_69, %c0_70] : memref<1x1x64xf32, #tpu.memory_space<vmem>>, vector<1x1x64xf32>
    %152 = vector.shape_cast %151 : vector<1x1x64xf32> to vector<1x64xf32>
    %153 = vector.broadcast %152 : vector<1x64xf32> to vector<16x64xf32>
    %154 = arith.addf %150, %153 : vector<16x64xf32>
    %cst_71 = arith.constant 5.000000e-01 : f32
    %155 = vector.broadcast %cst_71 : f32 to vector<16x64xf32>
    %156 = arith.mulf %155, %154 : vector<16x64xf32>
    %cst_72 = arith.constant 4.471500e-02 : f32
    %157 = vector.broadcast %cst_72 : f32 to vector<16x64xf32>
    %158 = arith.mulf %157, %154 : vector<16x64xf32>
    %159 = arith.mulf %158, %154 : vector<16x64xf32>
    %160 = arith.mulf %159, %154 : vector<16x64xf32>
    %161 = arith.addf %154, %160 : vector<16x64xf32>
    %cst_73 = arith.constant 0.797884583 : f32
    %162 = vector.broadcast %cst_73 : f32 to vector<16x64xf32>
    %163 = arith.mulf %162, %161 : vector<16x64xf32>
    %164 = math.tanh %163 : vector<16x64xf32>
    %cst_74 = arith.constant 1.000000e+00 : f32
    %165 = vector.broadcast %cst_74 : f32 to vector<16x64xf32>
    %166 = arith.addf %165, %164 : vector<16x64xf32>
    %167 = arith.mulf %156, %166 : vector<16x64xf32>
    %c0_75 = arith.constant 0 : index
    %c0_76 = arith.constant 0 : index
    %c0_77 = arith.constant 0 : index
    %168 = vector.load %arg13[%c0_75, %c0_76, %c0_77] : memref<1x64x32xf32, #tpu.memory_space<vmem>>, vector<1x64x32xf32>
    %169 = vector.shape_cast %168 : vector<1x64x32xf32> to vector<64x32xf32>
    %cst_78 = arith.constant dense<0.000000e+00> : vector<16x32xf32>
    %170 = tpu.matmul %167, %169, %cst_78 {dimension_numbers = #tpu.dot_dimension_numbers<[1], [0], [0], [1], [0, 0, 1, 1], [], []>} : vector<16x64xf32>, vector<64x32xf32>, vector<16x32xf32> -> vector<16x32xf32>
    %c0_79 = arith.constant 0 : index
    %c0_80 = arith.constant 0 : index
    %c0_81 = arith.constant 0 : index
    %171 = vector.load %arg14[%c0_79, %c0_80, %c0_81] : memref<1x1x32xf32, #tpu.memory_space<vmem>>, vector<1x1x32xf32>
    %172 = vector.shape_cast %171 : vector<1x1x32xf32> to vector<1x32xf32>
    %173 = vector.broadcast %172 : vector<1x32xf32> to vector<16x32xf32>
    %174 = arith.addf %170, %173 : vector<16x32xf32>
    %175 = arith.addf %121, %174 : vector<16x32xf32>
    %c0_82 = arith.constant 0 : index
    %c0_83 = arith.constant 0 : index
    %176 = vector.load %arg16[%c0_82, %c0_83] : memref<16x32xf32, #tpu.memory_space<vmem>>, vector<16x32xf32>
    tpu.vector_store %arg16[%c0_82, %c0_83], %175 {strides = array<i32>} : memref<16x32xf32, #tpu.memory_space<vmem>>, vector<16x32xf32>,
    %c1_i32 = arith.constant 1 : i32
    %177 = arith.cmpi eq, %arg1, %c1_i32 : i32
    %178 = arith.extui %177 : i1 to i32
    %c0_i32_84 = arith.constant 0 : i32
    %179 = arith.cmpi ne, %178, %c0_i32_84 : i32
    scf.if %179 {
      %c0_85 = arith.constant 0 : index
      %c0_86 = arith.constant 0 : index
      %180 = vector.load %arg16[%c0_85, %c0_86] : memref<16x32xf32, #tpu.memory_space<vmem>>, vector<16x32xf32>
      %c0_87 = arith.constant 0 : index
      %c0_88 = arith.constant 0 : index
      %c0_89 = arith.constant 0 : index
      %181 = vector.load %arg15[%c0_87, %c0_88, %c0_89] : memref<1x16x32xf32, #tpu.memory_space<vmem>>, vector<1x16x32xf32>
      %182 = vector.shape_cast %181 : vector<1x16x32xf32> to vector<16x32xf32>
      %183 = vector.shape_cast %180 : vector<16x32xf32> to vector<1x16x32xf32>
      tpu.vector_store %arg15[%c0_87, %c0_88, %c0_89], %183 {strides = array<i32>} : memref<1x16x32xf32, #tpu.memory_space<vmem>>, vector<1x16x32xf32>,
    } else {
    }
    return
  }
  func.func @transform_0(%arg0: i32, %arg1: i32) -> (i32, i32, i32) {
    %c0_i32 = arith.constant 0 : i32
    %c0_i32_0 = arith.constant 0 : i32
    %c0_i32_1 = arith.constant 0 : i32
    return %arg0, %c0_i32, %c0_i32_0 : i32, i32, i32
  }
  func.func @transform_1(%arg0: i32, %arg1: i32) -> (i32, i32, i32) {
    %c0_i32 = arith.constant 0 : i32
    %c0_i32_0 = arith.constant 0 : i32
    %c0_i32_1 = arith.constant 0 : i32
    %c0_i32_2 = arith.constant 0 : i32
    return %c0_i32, %c0_i32_0, %c0_i32_1 : i32, i32, i32
  }
  func.func @transform_2(%arg0: i32, %arg1: i32) -> (i32, i32, i32) {
    %c0_i32 = arith.constant 0 : i32
    %c0_i32_0 = arith.constant 0 : i32
    %c0_i32_1 = arith.constant 0 : i32
    return %arg1, %c0_i32, %c0_i32_0 : i32, i32, i32
  }
  func.func @transform_3(%arg0: i32, %arg1: i32) -> (i32, i32, i32) {
    %c0_i32 = arith.constant 0 : i32
    %c0_i32_0 = arith.constant 0 : i32
    %c0_i32_1 = arith.constant 0 : i32
    return %arg1, %c0_i32, %c0_i32_0 : i32, i32, i32
  }
  func.func @transform_4(%arg0: i32, %arg1: i32) -> (i32, i32, i32) {
    %c0_i32 = arith.constant 0 : i32
    %c0_i32_0 = arith.constant 0 : i32
    %c0_i32_1 = arith.constant 0 : i32
    return %arg1, %c0_i32, %c0_i32_0 : i32, i32, i32
  }
  func.func @transform_5(%arg0: i32, %arg1: i32) -> (i32, i32, i32) {
    %c0_i32 = arith.constant 0 : i32
    %c0_i32_0 = arith.constant 0 : i32
    %c0_i32_1 = arith.constant 0 : i32
    return %arg1, %c0_i32, %c0_i32_0 : i32, i32, i32
  }
  func.func @transform_6(%arg0: i32, %arg1: i32) -> (i32, i32, i32) {
    %c0_i32 = arith.constant 0 : i32
    %c0_i32_0 = arith.constant 0 : i32
    %c0_i32_1 = arith.constant 0 : i32
    return %arg1, %c0_i32, %c0_i32_0 : i32, i32, i32
  }
  func.func @transform_7(%arg0: i32, %arg1: i32) -> (i32, i32, i32) {
    %c0_i32 = arith.constant 0 : i32
    %c0_i32_0 = arith.constant 0 : i32
    %c0_i32_1 = arith.constant 0 : i32
    return %arg1, %c0_i32, %c0_i32_0 : i32, i32, i32
  }
  func.func @transform_8(%arg0: i32, %arg1: i32) -> (i32, i32, i32) {
    %c0_i32 = arith.constant 0 : i32
    %c0_i32_0 = arith.constant 0 : i32
    %c0_i32_1 = arith.constant 0 : i32
    return %arg1, %c0_i32, %c0_i32_0 : i32, i32, i32
  }
  func.func @transform_9(%arg0: i32, %arg1: i32) -> (i32, i32, i32) {
    %c0_i32 = arith.constant 0 : i32
    %c0_i32_0 = arith.constant 0 : i32
    %c0_i32_1 = arith.constant 0 : i32
    return %arg1, %c0_i32, %c0_i32_0 : i32, i32, i32
  }
  func.func @transform_10(%arg0: i32, %arg1: i32) -> (i32, i32, i32) {
    %c0_i32 = arith.constant 0 : i32
    %c0_i32_0 = arith.constant 0 : i32
    %c0_i32_1 = arith.constant 0 : i32
    return %arg1, %c0_i32, %c0_i32_0 : i32, i32, i32
  }
  func.func @transform_11(%arg0: i32, %arg1: i32) -> (i32, i32, i32) {
    %c0_i32 = arith.constant 0 : i32
    %c0_i32_0 = arith.constant 0 : i32
    %c0_i32_1 = arith.constant 0 : i32
    return %arg1, %c0_i32, %c0_i32_0 : i32, i32, i32
  }
  func.func @transform_12(%arg0: i32, %arg1: i32) -> (i32, i32, i32) {
    %c0_i32 = arith.constant 0 : i32
    %c0_i32_0 = arith.constant 0 : i32
    %c0_i32_1 = arith.constant 0 : i32
    return %arg1, %c0_i32, %c0_i32_0 : i32, i32, i32
  }
  func.func @transform_13(%arg0: i32, %arg1: i32) -> (i32, i32, i32) {
    %c0_i32 = arith.constant 0 : i32
    %c0_i32_0 = arith.constant 0 : i32
    %c0_i32_1 = arith.constant 0 : i32
    return %arg0, %c0_i32, %c0_i32_0 : i32, i32, i32
  }
}

</mosaic_0001>

<llo_original>
// kernel: tpu_custom_call.1
$region0: #{tpu_custom_call.1}
  #allocation0 [shape = 'u32[]', space=smem, size = 0x4, offset = 0x4, fixed_abs, tag = 'smem constant byte address 0x4 - core index']
  #allocation1 [shape = 'u32[144,128]{1,0:T(1,128)}', space=vmem, size = 0x12000, scoped, tag = 'internal scratch']
  #allocation2 [shape = 'f32[16,32]{1,0:T(8,128)}', space=vmem, size = 0x2000, scoped, tag = 'scratch operand']
  %s0 = inlined_call_operand.hbm [shape: f32[2,16,32], index: 0, kind: input, shape index: {}]
  %s1 = inlined_call_operand.hbm [shape: f32[1,16,32], index: 1, kind: input, shape index: {}]
  %s2 = inlined_call_operand.vmem [shape: f32[2,1,32], index: 2, kind: input, shape index: {}]
  %s3 = inlined_call_operand.hbm [shape: f32[2,1,32], index: 3, kind: input, shape index: {}]
  %s4 = inlined_call_operand.vmem [shape: f32[2,32,96], index: 4, kind: input, shape index: {}]
  %s5 = inlined_call_operand.vmem [shape: f32[2,32,32], index: 5, kind: input, shape index: {}]
  %s6 = inlined_call_operand.vmem [shape: f32[2,1,32], index: 6, kind: input, shape index: {}]
  %s7 = inlined_call_operand.vmem [shape: f32[2,1,32], index: 7, kind: input, shape index: {}]
  %s8 = inlined_call_operand.vmem [shape: f32[2,1,32], index: 8, kind: input, shape index: {}]
  %s9 = inlined_call_operand.vmem [shape: f32[2,32,64], index: 9, kind: input, shape index: {}]
  %s10 = inlined_call_operand.vmem [shape: f32[2,1,64], index: 10, kind: input, shape index: {}]
  %s11 = inlined_call_operand.vmem [shape: f32[2,64,32], index: 11, kind: input, shape index: {}]
  %s12 = inlined_call_operand.vmem [shape: f32[2,1,32], index: 12, kind: input, shape index: {}]
  %s13 = inlined_call_operand.hbm [shape: f32[2,16,32], index: 13, kind: output, shape index: {}]
  %s14 = sld [smem:[#allocation0]]
  $region105: #{tpu_custom_call.1} parent=0
    _
  %s16 = ssub.s32 1, %s14
  %s17 = scalar_select 0, %s16, %s14
  $region1: #{tpu_custom_call.1} parent=0
    #allocation3 [shape = 'u8[16384]{0}', space=vmem, size = 0x4000, scoped, tag = 'input window, operand 0']
    #allocation4 [shape = 's32[2]{0}', space=sflag, size = 0x8, scoped, tag = 'scoped memory for tpu_custom_call.1']
    #allocation5 [shape = 's32[2]{0}', space=sflag, size = 0x8, scoped, tag = 'scoped memory for tpu_custom_call.1']
    #allocation6 [shape = 'u8[8192]{0}', space=vmem, size = 0x2000, scoped, tag = 'input window, operand 1, single buffered']
    #allocation7 [shape = 's32[1]{0}', space=sflag, size = 0x4, scoped, tag = 'scoped memory for tpu_custom_call.1']
    #allocation8 [shape = 'u8[1024]{0}', space=vmem, size = 0x400, scoped, tag = 'input window, operand 3']
    #allocation9 [shape = 'u8[16384]{0}', space=vmem, size = 0x4000, scoped, tag = 'output window, operand 0']
    %18 = vsyncpa [#allocation4], 0
    %s19 = scalar_lea.sflag [#allocation4], 1
    %20 = vsyncpa %s19, 0
    %21 = vsyncpa [#allocation7], 0
    %22 = vsyncpa [#allocation5], 0
    %s23 = scalar_lea.sflag [#allocation5], 1
    %24 = vsyncpa %s23, 0
    loop: start=0, step=1, limit=6
    $region2: #{tpu_custom_call.1} parent=1 // loop_pre_header
      _
    $region3: #{tpu_custom_call.1} parent=1 // loop_header
      %s26 = sphi 0, %s30
      %p27 = scmp.ge.s32.totalorder %s26, 6
      %s33 = sphi 0, %s45
      %s34 = sphi 0, %s41
      %s35 = sphi 0, %s33
      %s36 = sphi 0, %s34
      %s37 = sphi 0, %s35
      %s38 = sphi 0, %s36
      %s48 = sphi 0, %s50
      %s51 = sphi 0, %s48
      %s52 = sphi 0, %s51
      %s68 = sphi 0, %s52
      %s72 = sphi 0, %s72
      %s74 = sphi 0, %s72
      %s75 = sphi 0, %s74
      %s89 = sphi 0, %s75
      %s95 = sphi 0, %s97
      %s98 = sphi 0, %s95
      %s99 = sphi 0, %s98
      %s115 = sphi 0, %s99
      %s121 = sphi 0, %s123
      %s124 = sphi 0, %s121
      %s125 = sphi 0, %s124
      %s141 = sphi 0, %s125
      %s147 = sphi 0, %s149
      %s150 = sphi 0, %s147
      %s151 = sphi 0, %s150
      %s167 = sphi 0, %s151
      %s173 = sphi 0, %s175
      %s176 = sphi 0, %s173
      %s177 = sphi 0, %s176
      %s193 = sphi 0, %s177
      %s199 = sphi 0, %s201
      %s202 = sphi 0, %s199
      %s203 = sphi 0, %s202
      %s219 = sphi 0, %s203
      %s225 = sphi 0, %s227
      %s228 = sphi 0, %s225
      %s229 = sphi 0, %s228
      %s245 = sphi 0, %s229
      %s251 = sphi 0, %s253
      %s254 = sphi 0, %s251
      %s255 = sphi 0, %s254
      %s271 = sphi 0, %s255
      %s277 = sphi 0, %s279
      %s280 = sphi 0, %s277
      %s281 = sphi 0, %s280
      %s297 = sphi 0, %s281
      %s303 = sphi 0, %s305
      %s306 = sphi 0, %s303
      %s307 = sphi 0, %s306
      %s323 = sphi 0, %s307
      %s329 = sphi 0, %s331
      %s332 = sphi 0, %s329
      %s333 = sphi 0, %s332
      %s349 = sphi 0, %s333
      %s355 = sphi 0, %s357
      %s358 = sphi 0, %s355
      %s359 = sphi 0, %s358
      %s375 = sphi 0, %s359
      %s381 = sphi 0, %s383
      %s384 = sphi 0, %s381
      %s385 = sphi 0, %s384
      %s401 = sphi 0, %s385
    $region4: #{tpu_custom_call.1} parent=1 // loop_header_branch
      %29 = sbr.rel (%p27) target = $region8
    $region5: #{tpu_custom_call.1} parent=1 // loop_body
      %s31 = ssub.s32 %s26, 1
      %s32 = ssub.s32 %s26, 2
      %s39 = sadd.s32 1, %s34
      %p40 = scmp.ge.s32.totalorder %s39, 2
      %s41 = scalar_select %p40, 0, %s39
      %s42 = sadd.s32 1, %s33
      %s43 = scalar_select %p40, %s42, %s33
      %p44 = scmp.ge.s32.totalorder %s43, 2
      %s45 = scalar_select %p44, 0, %s43
      %s46 = ssub.s32 %s33, %s45
      %p47 = scmp.eq.s32.totalorder %s46, 0
      %s49 = sadd.s32 %s48, 1
      %s50 = scalar_select %p47, %s48, %s49
      %p53 = pneg %p47
      %p54 = scmp.eq.s32.totalorder %s26, 3
      %p55 = por %p53, %p54
      %p56 = scmp.ne.s32.totalorder %s48, %s51
      %p57 = scmp.eq.s32.totalorder %s26, 0
      %p58 = por %p56, %p57
      %p59 = scmp.ne.s32.totalorder %s48, %s51
      %p60 = scmp.eq.s32.totalorder %s31, 3
      %p61 = por %p59, %p60
      %p62 = scmp.ne.s32.totalorder %s51, %s52
      %p63 = scmp.eq.s32.totalorder %s31, 0
      %p64 = por %p62, %p63
      %p65 = scmp.ne.s32.totalorder %s51, %s52
      %p66 = scmp.eq.s32.totalorder %s32, 3
      %p67 = por %p65, %p66
      %p69 = scmp.ne.s32.totalorder %s52, %s68
      %p70 = scmp.eq.s32.totalorder %s32, 0
      %p71 = por %p69, %p70
      %s73 = sadd.s32 %s72, 1
      %p76 = scmp.eq.s32.totalorder %s26, 3
      %p77 = scmp.ne.s32.totalorder %s72, %s74
      %p78 = scmp.eq.s32.totalorder %s26, 0
      %p79 = por %p77, %p78
      %p80 = scmp.ne.s32.totalorder %s72, %s74
      %p81 = scmp.eq.s32.totalorder %s31, 3
      %p82 = por %p80, %p81
      %p83 = scmp.ne.s32.totalorder %s74, %s75
      %p84 = scmp.eq.s32.totalorder %s31, 0
      %p85 = por %p83, %p84
      %p86 = scmp.ne.s32.totalorder %s74, %s75
      %p87 = scmp.eq.s32.totalorder %s32, 3
      %p88 = por %p86, %p87
      %p90 = scmp.ne.s32.totalorder %s75, %s89
      %p91 = scmp.eq.s32.totalorder %s32, 0
      %p92 = por %p90, %p91
      %s93 = ssub.s32 %s34, %s41
      %p94 = scmp.eq.s32.totalorder %s93, 0
      %s96 = sadd.s32 %s95, 1
      %s97 = scalar_select %p94, %s95, %s96
      %p100 = pneg %p94
      %p101 = scmp.eq.s32.totalorder %s26, 3
      %p102 = por %p100, %p101
      %p103 = scmp.ne.s32.totalorder %s95, %s98
      %p104 = scmp.eq.s32.totalorder %s26, 0
      %p105 = por %p103, %p104
      %p106 = scmp.ne.s32.totalorder %s95, %s98
      %p107 = scmp.eq.s32.totalorder %s31, 3
      %p108 = por %p106, %p107
      %p109 = scmp.ne.s32.totalorder %s98, %s99
      %p110 = scmp.eq.s32.totalorder %s31, 0
      %p111 = por %p109, %p110
      %p112 = scmp.ne.s32.totalorder %s98, %s99
      %p113 = scmp.eq.s32.totalorder %s32, 3
      %p114 = por %p112, %p113
      %p116 = scmp.ne.s32.totalorder %s99, %s115
      %p117 = scmp.eq.s32.totalorder %s32, 0
      %p118 = por %p116, %p117
      %s119 = ssub.s32 %s34, %s41
      %p120 = scmp.eq.s32.totalorder %s119, 0
      %s122 = sadd.s32 %s121, 1
      %s123 = scalar_select %p120, %s121, %s122
      %p126 = pneg %p120
      %p127 = scmp.eq.s32.totalorder %s26, 3
      %p128 = por %p126, %p127
      %p129 = scmp.ne.s32.totalorder %s121, %s124
      %p130 = scmp.eq.s32.totalorder %s26, 0
      %p131 = por %p129, %p130
      %p132 = scmp.ne.s32.totalorder %s121, %s124
      %p133 = scmp.eq.s32.totalorder %s31, 3
      %p134 = por %p132, %p133
      %p135 = scmp.ne.s32.totalorder %s124, %s125
      %p136 = scmp.eq.s32.totalorder %s31, 0
      %p137 = por %p135, %p136
      %p138 = scmp.ne.s32.totalorder %s124, %s125
      %p139 = scmp.eq.s32.totalorder %s32, 3
      %p140 = por %p138, %p139
      %p142 = scmp.ne.s32.totalorder %s125, %s141
      %p143 = scmp.eq.s32.totalorder %s32, 0
      %p144 = por %p142, %p143
      %s145 = ssub.s32 %s34, %s41
      %p146 = scmp.eq.s32.totalorder %s145, 0
      %s148 = sadd.s32 %s147, 1
      %s149 = scalar_select %p146, %s147, %s148
      %p152 = pneg %p146
      %p153 = scmp.eq.s32.totalorder %s26, 3
      %p154 = por %p152, %p153
      %p155 = scmp.ne.s32.totalorder %s147, %s150
      %p156 = scmp.eq.s32.totalorder %s26, 0
      %p157 = por %p155, %p156
      %p158 = scmp.ne.s32.totalorder %s147, %s150
      %p159 = scmp.eq.s32.totalorder %s31, 3
      %p160 = por %p158, %p159
      %p161 = scmp.ne.s32.totalorder %s150, %s151
      %p162 = scmp.eq.s32.totalorder %s31, 0
      %p163 = por %p161, %p162
      %p164 = scmp.ne.s32.totalorder %s150, %s151
      %p165 = scmp.eq.s32.totalorder %s32, 3
      %p166 = por %p164, %p165
      %p168 = scmp.ne.s32.totalorder %s151, %s167
      %p169 = scmp.eq.s32.totalorder %s32, 0
      %p170 = por %p168, %p169
      %s171 = ssub.s32 %s34, %s41
      %p172 = scmp.eq.s32.totalorder %s171, 0
      %s174 = sadd.s32 %s173, 1
      %s175 = scalar_select %p172, %s173, %s174
      %p178 = pneg %p172
      %p179 = scmp.eq.s32.totalorder %s26, 3
      %p180 = por %p178, %p179
      %p181 = scmp.ne.s32.totalorder %s173, %s176
      %p182 = scmp.eq.s32.totalorder %s26, 0
      %p183 = por %p181, %p182
      %p184 = scmp.ne.s32.totalorder %s173, %s176
      %p185 = scmp.eq.s32.totalorder %s31, 3
      %p186 = por %p184, %p185
      %p187 = scmp.ne.s32.totalorder %s176, %s177
      %p188 = scmp.eq.s32.totalorder %s31, 0
      %p189 = por %p187, %p188
      %p190 = scmp.ne.s32.totalorder %s176, %s177
      %p191 = scmp.eq.s32.totalorder %s32, 3
      %p192 = por %p190, %p191
      %p194 = scmp.ne.s32.totalorder %s177, %s193
      %p195 = scmp.eq.s32.totalorder %s32, 0
      %p196 = por %p194, %p195
      %s197 = ssub.s32 %s34, %s41
      %p198 = scmp.eq.s32.totalorder %s197, 0
      %s200 = sadd.s32 %s199, 1
      %s201 = scalar_select %p198, %s199, %s200
      %p204 = pneg %p198
      %p205 = scmp.eq.s32.totalorder %s26, 3
      %p206 = por %p204, %p205
      %p207 = scmp.ne.s32.totalorder %s199, %s202
      %p208 = scmp.eq.s32.totalorder %s26, 0
      %p209 = por %p207, %p208
      %p210 = scmp.ne.s32.totalorder %s199, %s202
      %p211 = scmp.eq.s32.totalorder %s31, 3
      %p212 = por %p210, %p211
      %p213 = scmp.ne.s32.totalorder %s202, %s203
      %p214 = scmp.eq.s32.totalorder %s31, 0
      %p215 = por %p213, %p214
      %p216 = scmp.ne.s32.totalorder %s202, %s203
      %p217 = scmp.eq.s32.totalorder %s32, 3
      %p218 = por %p216, %p217
      %p220 = scmp.ne.s32.totalorder %s203, %s219
      %p221 = scmp.eq.s32.totalorder %s32, 0
      %p222 = por %p220, %p221
      %s223 = ssub.s32 %s34, %s41
      %p224 = scmp.eq.s32.totalorder %s223, 0
      %s226 = sadd.s32 %s225, 1
      %s227 = scalar_select %p224, %s225, %s226
      %p230 = pneg %p224
      %p231 = scmp.eq.s32.totalorder %s26, 3
      %p232 = por %p230, %p231
      %p233 = scmp.ne.s32.totalorder %s225, %s228
      %p234 = scmp.eq.s32.totalorder %s26, 0
      %p235 = por %p233, %p234
      %p236 = scmp.ne.s32.totalorder %s225, %s228
      %p237 = scmp.eq.s32.totalorder %s31, 3
      %p238 = por %p236, %p237
      %p239 = scmp.ne.s32.totalorder %s228, %s229
      %p240 = scmp.eq.s32.totalorder %s31, 0
      %p241 = por %p239, %p240
      %p242 = scmp.ne.s32.totalorder %s228, %s229
      %p243 = scmp.eq.s32.totalorder %s32, 3
      %p244 = por %p242, %p243
      %p246 = scmp.ne.s32.totalorder %s229, %s245
      %p247 = scmp.eq.s32.totalorder %s32, 0
      %p248 = por %p246, %p247
      %s249 = ssub.s32 %s34, %s41
      %p250 = scmp.eq.s32.totalorder %s249, 0
      %s252 = sadd.s32 %s251, 1
      %s253 = scalar_select %p250, %s251, %s252
      %p256 = pneg %p250
      %p257 = scmp.eq.s32.totalorder %s26, 3
      %p258 = por %p256, %p257
      %p259 = scmp.ne.s32.totalorder %s251, %s254
      %p260 = scmp.eq.s32.totalorder %s26, 0
      %p261 = por %p259, %p260
      %p262 = scmp.ne.s32.totalorder %s251, %s254
      %p263 = scmp.eq.s32.totalorder %s31, 3
      %p264 = por %p262, %p263
      %p265 = scmp.ne.s32.totalorder %s254, %s255
      %p266 = scmp.eq.s32.totalorder %s31, 0
      %p267 = por %p265, %p266
      %p268 = scmp.ne.s32.totalorder %s254, %s255
      %p269 = scmp.eq.s32.totalorder %s32, 3
      %p270 = por %p268, %p269
      %p272 = scmp.ne.s32.totalorder %s255, %s271
      %p273 = scmp.eq.s32.totalorder %s32, 0
      %p274 = por %p272, %p273
      %s275 = ssub.s32 %s34, %s41
      %p276 = scmp.eq.s32.totalorder %s275, 0
      %s278 = sadd.s32 %s277, 1
      %s279 = scalar_select %p276, %s277, %s278
      %p282 = pneg %p276
      %p283 = scmp.eq.s32.totalorder %s26, 3
      %p284 = por %p282, %p283
      %p285 = scmp.ne.s32.totalorder %s277, %s280
      %p286 = scmp.eq.s32.totalorder %s26, 0
      %p287 = por %p285, %p286
      %p288 = scmp.ne.s32.totalorder %s277, %s280
      %p289 = scmp.eq.s32.totalorder %s31, 3
      %p290 = por %p288, %p289
      %p291 = scmp.ne.s32.totalorder %s280, %s281
      %p292 = scmp.eq.s32.totalorder %s31, 0
      %p293 = por %p291, %p292
      %p294 = scmp.ne.s32.totalorder %s280, %s281
      %p295 = scmp.eq.s32.totalorder %s32, 3
      %p296 = por %p294, %p295
      %p298 = scmp.ne.s32.totalorder %s281, %s297
      %p299 = scmp.eq.s32.totalorder %s32, 0
      %p300 = por %p298, %p299
      %s301 = ssub.s32 %s34, %s41
      %p302 = scmp.eq.s32.totalorder %s301, 0
      %s304 = sadd.s32 %s303, 1
      %s305 = scalar_select %p302, %s303, %s304
      %p308 = pneg %p302
      %p309 = scmp.eq.s32.totalorder %s26, 3
      %p310 = por %p308, %p309
      %p311 = scmp.ne.s32.totalorder %s303, %s306
      %p312 = scmp.eq.s32.totalorder %s26, 0
      %p313 = por %p311, %p312
      %p314 = scmp.ne.s32.totalorder %s303, %s306
      %p315 = scmp.eq.s32.totalorder %s31, 3
      %p316 = por %p314, %p315
      %p317 = scmp.ne.s32.totalorder %s306, %s307
      %p318 = scmp.eq.s32.totalorder %s31, 0
      %p319 = por %p317, %p318
      %p320 = scmp.ne.s32.totalorder %s306, %s307
      %p321 = scmp.eq.s32.totalorder %s32, 3
      %p322 = por %p320, %p321
      %p324 = scmp.ne.s32.totalorder %s307, %s323
      %p325 = scmp.eq.s32.totalorder %s32, 0
      %p326 = por %p324, %p325
      %s327 = ssub.s32 %s34, %s41
      %p328 = scmp.eq.s32.totalorder %s327, 0
      %s330 = sadd.s32 %s329, 1
      %s331 = scalar_select %p328, %s329, %s330
      %p334 = pneg %p328
      %p335 = scmp.eq.s32.totalorder %s26, 3
      %p336 = por %p334, %p335
      %p337 = scmp.ne.s32.totalorder %s329, %s332
      %p338 = scmp.eq.s32.totalorder %s26, 0
      %p339 = por %p337, %p338
      %p340 = scmp.ne.s32.totalorder %s329, %s332
      %p341 = scmp.eq.s32.totalorder %s31, 3
      %p342 = por %p340, %p341
      %p343 = scmp.ne.s32.totalorder %s332, %s333
      %p344 = scmp.eq.s32.totalorder %s31, 0
      %p345 = por %p343, %p344
      %p346 = scmp.ne.s32.totalorder %s332, %s333
      %p347 = scmp.eq.s32.totalorder %s32, 3
      %p348 = por %p346, %p347
      %p350 = scmp.ne.s32.totalorder %s333, %s349
      %p351 = scmp.eq.s32.totalorder %s32, 0
      %p352 = por %p350, %p351
      %s353 = ssub.s32 %s34, %s41
      %p354 = scmp.eq.s32.totalorder %s353, 0
      %s356 = sadd.s32 %s355, 1
      %s357 = scalar_select %p354, %s355, %s356
      %p360 = pneg %p354
      %p361 = scmp.eq.s32.totalorder %s26, 3
      %p362 = por %p360, %p361
      %p363 = scmp.ne.s32.totalorder %s355, %s358
      %p364 = scmp.eq.s32.totalorder %s26, 0
      %p365 = por %p363, %p364
      %p366 = scmp.ne.s32.totalorder %s355, %s358
      %p367 = scmp.eq.s32.totalorder %s31, 3
      %p368 = por %p366, %p367
      %p369 = scmp.ne.s32.totalorder %s358, %s359
      %p370 = scmp.eq.s32.totalorder %s31, 0
      %p371 = por %p369, %p370
      %p372 = scmp.ne.s32.totalorder %s358, %s359
      %p373 = scmp.eq.s32.totalorder %s32, 3
      %p374 = por %p372, %p373
      %p376 = scmp.ne.s32.totalorder %s359, %s375
      %p377 = scmp.eq.s32.totalorder %s32, 0
      %p378 = por %p376, %p377
      %s379 = ssub.s32 %s33, %s45
      %p380 = scmp.eq.s32.totalorder %s379, 0
      %s382 = sadd.s32 %s381, 1
      %s383 = scalar_select %p380, %s381, %s382
      %p386 = pneg %p380
      %p387 = scmp.eq.s32.totalorder %s26, 3
      %p388 = por %p386, %p387
      %p389 = scmp.ne.s32.totalorder %s381, %s384
      %p390 = scmp.eq.s32.totalorder %s26, 0
      %p391 = por %p389, %p390
      %p392 = scmp.ne.s32.totalorder %s381, %s384
      %p393 = scmp.eq.s32.totalorder %s31, 3
      %p394 = por %p392, %p393
      %p395 = scmp.ne.s32.totalorder %s384, %s385
      %p396 = scmp.eq.s32.totalorder %s31, 0
      %p397 = por %p395, %p396
      %p398 = scmp.ne.s32.totalorder %s384, %s385
      %p399 = scmp.eq.s32.totalorder %s32, 3
      %p400 = por %p398, %p399
      %p402 = scmp.ne.s32.totalorder %s385, %s401
      %p403 = scmp.eq.s32.totalorder %s32, 0
      %p404 = por %p402, %p403
      %p405 = scmp.le.s32.totalorder 1, %s26
      %p406 = scmp.lt.s32.totalorder %s26, 5
      %p407 = pnand %p405, %p406
      %p408 = pneg %p407
      // Predicated region
      $region9: #{tpu_custom_call.1} parent=5 // pred_check
        _
      $region10: #{tpu_custom_call.1} parent=5 // pred_check_branch
        %410 = sbr.rel (%p407) target = $region12
      $region11: #{tpu_custom_call.1} parent=5 // pred_region
        %s411 = ssub.s32 %s26, 1
        // Predicated region
        $region13: #{tpu_custom_call.1} parent=11 // pred_check
          %p412 = pneg %p85
        $region14: #{tpu_custom_call.1} parent=11 // pred_check_branch
          %414 = sbr.rel (%p412) target = $region16
        $region15: #{tpu_custom_call.1} parent=11 // pred_region
          %s416 = ssub.s32 256, 256
          %417 = vsyncadd [#allocation7], %s416
          %s418 = sshll.u32 [#allocation6], 4
          %s419 = int_to_ptr.vmem [resolvable:$true] %s418
          %424 = dma.hbm_to_vmem [thread:$0]  %s1, 256, %s419, [#allocation7], 128, 128, 8
        $region16: #{tpu_custom_call.1} parent=11 // pred_fallthru
          _
      $region12: #{tpu_custom_call.1} parent=5 // pred_fallthru
        _
      %p425 = scmp.lt.s32.totalorder %s26, 4
      // Predicated region
      $region17: #{tpu_custom_call.1} parent=5 // pred_check
        %p426 = pneg %p425
      $region18: #{tpu_custom_call.1} parent=5 // pred_check_branch
        %428 = sbr.rel (%p426) target = $region20
      $region19: #{tpu_custom_call.1} parent=5 // pred_region
        // Predicated region
        $region21: #{tpu_custom_call.1} parent=19 // pred_check
          %p429 = pneg %p58
        $region22: #{tpu_custom_call.1} parent=19 // pred_check_branch
          %431 = sbr.rel (%p429) target = $region24
        $region23: #{tpu_custom_call.1} parent=19 // pred_region
          %s432 = sand.u32 %s26, 1
          %s433 = scalar_lea.sflag [#allocation4], %s432
          %s434 = sand.u32 %s48, 1
          %s435 = smul.addr %s434, 16
          %s436 = scalar_lea.vmem [#allocation3], %s435
          %s438 = ssub.s32 256, 256
          %439 = vsyncadd %s433, %s438
          %s440 = smul.addr %s33, 2
          %s441 = smul.addr %s440, 128
          %s442 = scalar_lea.hbm %s0, %s441
          %s443 = sshll.u32 %s436, 4
          %s444 = int_to_ptr.vmem [resolvable:$true] %s443
          %449 = dma.hbm_to_vmem [thread:$0]  %s442, 256, %s444, %s433, 128, 128, 8
        $region24: #{tpu_custom_call.1} parent=19 // pred_fallthru
          _
        // Predicated region
        $region25: #{tpu_custom_call.1} parent=19 // pred_check
          %p450 = pneg %p105
        $region26: #{tpu_custom_call.1} parent=19 // pred_check_branch
          %452 = sbr.rel (%p450) target = $region28
        $region27: #{tpu_custom_call.1} parent=19 // pred_region
          %p453 = scmp.lt.s32.totalorder %s34, 1
          %s454 = scalar_select %p453, %s34, 1
          %s455 = scalar_lea.vmem %s2, %s454
        $region28: #{tpu_custom_call.1} parent=19 // pred_fallthru
          _
        // Predicated region
        $region29: #{tpu_custom_call.1} parent=19 // pred_check
          %p456 = pneg %p131
        $region30: #{tpu_custom_call.1} parent=19 // pred_check_branch
          %458 = sbr.rel (%p456) target = $region32
        $region31: #{tpu_custom_call.1} parent=19 // pred_region
          %s459 = sand.u32 %s26, 1
          %s460 = scalar_lea.sflag [#allocation4], %s459
          %s461 = sand.u32 %s121, 1
          %s462 = scalar_lea.vmem [#allocation8], %s461
          %s464 = ssub.s32 16, 16
          %465 = vsyncadd %s460, %s464
          %s466 = smul.addr %s34, 16
          %s467 = scalar_lea.hbm %s3, %s466
          %s469 = sshll.u32 %s462, 4
          %s470 = int_to_ptr.vmem [resolvable:$true] %s469
          %472 = dma.hbm_to_vmem [thread:$0]  %s467, 16, %s470, %s460
        $region32: #{tpu_custom_call.1} parent=19 // pred_fallthru
          _
        // Predicated region
        $region33: #{tpu_custom_call.1} parent=19 // pred_check
          %p473 = pneg %p157
        $region34: #{tpu_custom_call.1} parent=19 // pred_check_branch
          %475 = sbr.rel (%p473) target = $region36
        $region35: #{tpu_custom_call.1} parent=19 // pred_region
          %p476 = scmp.lt.s32.totalorder %s34, 1
          %s477 = scalar_select %p476, %s34, 1
          %s478 = smul.addr %s477, 4
          %s479 = smul.addr %s478, 8
          %s480 = scalar_lea.vmem %s4, %s479
        $region36: #{tpu_custom_call.1} parent=19 // pred_fallthru
          _
        // Predicated region
        $region37: #{tpu_custom_call.1} parent=19 // pred_check
          %p481 = pneg %p183
        $region38: #{tpu_custom_call.1} parent=19 // pred_check_branch
          %483 = sbr.rel (%p481) target = $region40
        $region39: #{tpu_custom_call.1} parent=19 // pred_region
          %p484 = scmp.lt.s32.totalorder %s34, 1
          %s485 = scalar_select %p484, %s34, 1
          %s486 = smul.addr %s485, 4
          %s487 = smul.addr %s486, 8
          %s488 = scalar_lea.vmem %s5, %s487
        $region40: #{tpu_custom_call.1} parent=19 // pred_fallthru
          _
        // Predicated region
        $region41: #{tpu_custom_call.1} parent=19 // pred_check
          %p489 = pneg %p209
        $region42: #{tpu_custom_call.1} parent=19 // pred_check_branch
          %491 = sbr.rel (%p489) target = $region44
        $region43: #{tpu_custom_call.1} parent=19 // pred_region
          %p492 = scmp.lt.s32.totalorder %s34, 1
          %s493 = scalar_select %p492, %s34, 1
          %s494 = scalar_lea.vmem %s6, %s493
        $region44: #{tpu_custom_call.1} parent=19 // pred_fallthru
          _
        // Predicated region
        $region45: #{tpu_custom_call.1} parent=19 // pred_check
          %p495 = pneg %p235
        $region46: #{tpu_custom_call.1} parent=19 // pred_check_branch
          %497 = sbr.rel (%p495) target = $region48
        $region47: #{tpu_custom_call.1} parent=19 // pred_region
          %p498 = scmp.lt.s32.totalorder %s34, 1
          %s499 = scalar_select %p498, %s34, 1
          %s500 = scalar_lea.vmem %s7, %s499
        $region48: #{tpu_custom_call.1} parent=19 // pred_fallthru
          _
        // Predicated region
        $region49: #{tpu_custom_call.1} parent=19 // pred_check
          %p501 = pneg %p261
        $region50: #{tpu_custom_call.1} parent=19 // pred_check_branch
          %503 = sbr.rel (%p501) target = $region52
        $region51: #{tpu_custom_call.1} parent=19 // pred_region
          %p504 = scmp.lt.s32.totalorder %s34, 1
          %s505 = scalar_select %p504, %s34, 1
          %s506 = scalar_lea.vmem %s8, %s505
        $region52: #{tpu_custom_call.1} parent=19 // pred_fallthru
          _
        // Predicated region
        $region53: #{tpu_custom_call.1} parent=19 // pred_check
          %p507 = pneg %p287
        $region54: #{tpu_custom_call.1} parent=19 // pred_check_branch
          %509 = sbr.rel (%p507) target = $region56
        $region55: #{tpu_custom_call.1} parent=19 // pred_region
          %p510 = scmp.lt.s32.totalorder %s34, 1
          %s511 = scalar_select %p510, %s34, 1
          %s512 = smul.addr %s511, 4
          %s513 = smul.addr %s512, 8
          %s514 = scalar_lea.vmem %s9, %s513
        $region56: #{tpu_custom_call.1} parent=19 // pred_fallthru
          _
        // Predicated region
        $region57: #{tpu_custom_call.1} parent=19 // pred_check
          %p515 = pneg %p313
        $region58: #{tpu_custom_call.1} parent=19 // pred_check_branch
          %517 = sbr.rel (%p515) target = $region60
        $region59: #{tpu_custom_call.1} parent=19 // pred_region
          %p518 = scmp.lt.s32.totalorder %s34, 1
          %s519 = scalar_select %p518, %s34, 1
          %s520 = scalar_lea.vmem %s10, %s519
        $region60: #{tpu_custom_call.1} parent=19 // pred_fallthru
          _
        // Predicated region
        $region61: #{tpu_custom_call.1} parent=19 // pred_check
          %p521 = pneg %p339
        $region62: #{tpu_custom_call.1} parent=19 // pred_check_branch
          %523 = sbr.rel (%p521) target = $region64
        $region63: #{tpu_custom_call.1} parent=19 // pred_region
          %p524 = scmp.lt.s32.totalorder %s34, 1
          %s525 = scalar_select %p524, %s34, 1
          %s526 = smul.addr %s525, 8
          %s527 = smul.addr %s526, 8
          %s528 = scalar_lea.vmem %s11, %s527
        $region64: #{tpu_custom_call.1} parent=19 // pred_fallthru
          _
        // Predicated region
        $region65: #{tpu_custom_call.1} parent=19 // pred_check
          %p529 = pneg %p365
        $region66: #{tpu_custom_call.1} parent=19 // pred_check_branch
          %531 = sbr.rel (%p529) target = $region68
        $region67: #{tpu_custom_call.1} parent=19 // pred_region
          %p532 = scmp.lt.s32.totalorder %s34, 1
          %s533 = scalar_select %p532, %s34, 1
          %s534 = scalar_lea.vmem %s12, %s533
        $region68: #{tpu_custom_call.1} parent=19 // pred_fallthru
          _
      $region20: #{tpu_custom_call.1} parent=5 // pred_fallthru
        _
      %p535 = scmp.le.s32.totalorder 1, %s26
      %p536 = scmp.lt.s32.totalorder %s26, 5
      %p537 = pnand %p535, %p536
      %p538 = pneg %p537
      // Predicated region
      $region69: #{tpu_custom_call.1} parent=5 // pred_check
        _
      $region70: #{tpu_custom_call.1} parent=5 // pred_check_branch
        %540 = sbr.rel (%p537) target = $region72
      $region71: #{tpu_custom_call.1} parent=5 // pred_region
        %s541 = ssub.s32 %s26, 1
        %s542 = sand.u32 %s31, 1
        %s543 = scalar_lea.sflag [#allocation4], %s542
        %s544 = sand.u32 %s51, 1
        %s545 = smul.addr %s544, 16
        %s546 = scalar_lea.vmem [#allocation3], %s545
        // Predicated region
        $region73: #{tpu_custom_call.1} parent=71 // pred_check
          %p547 = pneg %p64
        $region74: #{tpu_custom_call.1} parent=71 // pred_check_branch
          %549 = sbr.rel (%p547) target = $region76
        $region75: #{tpu_custom_call.1} parent=71 // pred_region
          %550 = dma.done %s543, 256
        $region76: #{tpu_custom_call.1} parent=71 // pred_fallthru
          _
        // Predicated region
        $region77: #{tpu_custom_call.1} parent=71 // pred_check
          %p551 = pneg %p85
        $region78: #{tpu_custom_call.1} parent=71 // pred_check_branch
          %553 = sbr.rel (%p551) target = $region80
        $region79: #{tpu_custom_call.1} parent=71 // pred_region
          %554 = dma.done [#allocation7], 256
        $region80: #{tpu_custom_call.1} parent=71 // pred_fallthru
          _
        %s555 = sand.u32 %s31, 1
        %s556 = scalar_lea.sflag [#allocation4], %s555
        %s557 = sand.u32 %s124, 1
        %s558 = scalar_lea.vmem [#allocation8], %s557
        // Predicated region
        $region81: #{tpu_custom_call.1} parent=71 // pred_check
          %p559 = pneg %p137
        $region82: #{tpu_custom_call.1} parent=71 // pred_check_branch
          %561 = sbr.rel (%p559) target = $region84
        $region83: #{tpu_custom_call.1} parent=71 // pred_region
          %562 = dma.done %s556, 16
        $region84: #{tpu_custom_call.1} parent=71 // pred_fallthru
          _
        %s563 = sand.u32 %s31, 1
        %s564 = scalar_lea.sflag [#allocation4], %s563
        %s565 = sand.u32 %s51, 1
        %s566 = smul.addr %s565, 16
        %s567 = scalar_lea.vmem [#allocation3], %s566
        %p568 = pneg %p64
        %p569 = pneg %p61
        %p570 = pneg %p85
        %p571 = pneg %p82
        %p572 = scmp.lt.s32.totalorder %s36, 1
        %s573 = scalar_select %p572, %s36, 1
        %s574 = scalar_lea.vmem %s2, %s573
        %p575 = pneg %p111
        %p576 = pneg %p108
        %s577 = sand.u32 %s31, 1
        %s578 = scalar_lea.sflag [#allocation4], %s577
        %s579 = sand.u32 %s124, 1
        %s580 = scalar_lea.vmem [#allocation8], %s579
        %p581 = pneg %p137
        %p582 = pneg %p134
        %p583 = scmp.lt.s32.totalorder %s36, 1
        %s584 = scalar_select %p583, %s36, 1
        %s585 = smul.addr %s584, 4
        %s586 = smul.addr %s585, 8
        %s587 = scalar_lea.vmem %s4, %s586
        %p588 = pneg %p163
        %p589 = pneg %p160
        %p590 = scmp.lt.s32.totalorder %s36, 1
        %s591 = scalar_select %p590, %s36, 1
        %s592 = smul.addr %s591, 4
        %s593 = smul.addr %s592, 8
        %s594 = scalar_lea.vmem %s5, %s593
        %p595 = pneg %p189
        %p596 = pneg %p186
        %p597 = scmp.lt.s32.totalorder %s36, 1
        %s598 = scalar_select %p597, %s36, 1
        %s599 = scalar_lea.vmem %s6, %s598
        %p600 = pneg %p215
        %p601 = pneg %p212
        %p602 = scmp.lt.s32.totalorder %s36, 1
        %s603 = scalar_select %p602, %s36, 1
        %s604 = scalar_lea.vmem %s7, %s603
        %p605 = pneg %p241
        %p606 = pneg %p238
        %p607 = scmp.lt.s32.totalorder %s36, 1
        %s608 = scalar_select %p607, %s36, 1
        %s609 = scalar_lea.vmem %s8, %s608
        %p610 = pneg %p267
        %p611 = pneg %p264
        %p612 = scmp.lt.s32.totalorder %s36, 1
        %s613 = scalar_select %p612, %s36, 1
        %s614 = smul.addr %s613, 4
        %s615 = smul.addr %s614, 8
        %s616 = scalar_lea.vmem %s9, %s615
        %p617 = pneg %p293
        %p618 = pneg %p290
        %p619 = scmp.lt.s32.totalorder %s36, 1
        %s620 = scalar_select %p619, %s36, 1
        %s621 = scalar_lea.vmem %s10, %s620
        %p622 = pneg %p319
        %p623 = pneg %p316
        %p624 = scmp.lt.s32.totalorder %s36, 1
        %s625 = scalar_select %p624, %s36, 1
        %s626 = smul.addr %s625, 8
        %s627 = smul.addr %s626, 8
        %s628 = scalar_lea.vmem %s11, %s627
        %p629 = pneg %p345
        %p630 = pneg %p342
        %p631 = scmp.lt.s32.totalorder %s36, 1
        %s632 = scalar_select %p631, %s36, 1
        %s633 = scalar_lea.vmem %s12, %s632
        %p634 = pneg %p371
        %p635 = pneg %p368
        %p636 = pneg %p397
        %p637 = pneg %p394
        %s638 = sand.u32 %s384, 1
        %s639 = scalar_lea.sflag [#allocation5], %s638
        %s640 = sand.u32 %s384, 1
        %s641 = smul.addr %s640, 16
        %s642 = scalar_lea.vmem [#allocation9], %s641
        %p643 = scmp.lt.s32.totalorder %s36, 1
        %s644 = scalar_select %p643, %s36, 1
        %s645 = scalar_lea.vmem %s2, %s644
        %p646 = scmp.lt.s32.totalorder %s36, 1
        %s647 = scalar_select %p646, %s36, 1
        %s648 = smul.addr %s647, 4
        %s649 = smul.addr %s648, 8
        %s650 = scalar_lea.vmem %s4, %s649
        %p651 = scmp.lt.s32.totalorder %s36, 1
        %s652 = scalar_select %p651, %s36, 1
        %s653 = smul.addr %s652, 4
        %s654 = smul.addr %s653, 8
        %s655 = scalar_lea.vmem %s5, %s654
        %p656 = scmp.lt.s32.totalorder %s36, 1
        %s657 = scalar_select %p656, %s36, 1
        %s658 = scalar_lea.vmem %s6, %s657
        %p659 = scmp.lt.s32.totalorder %s36, 1
        %s660 = scalar_select %p659, %s36, 1
        %s661 = scalar_lea.vmem %s7, %s660
        %p662 = scmp.lt.s32.totalorder %s36, 1
        %s663 = scalar_select %p662, %s36, 1
        %s664 = scalar_lea.vmem %s8, %s663
        %p665 = scmp.lt.s32.totalorder %s36, 1
        %s666 = scalar_select %p665, %s36, 1
        %s667 = smul.addr %s666, 4
        %s668 = smul.addr %s667, 8
        %s669 = scalar_lea.vmem %s9, %s668
        %p670 = scmp.lt.s32.totalorder %s36, 1
        %s671 = scalar_select %p670, %s36, 1
        %s672 = scalar_lea.vmem %s10, %s671
        %p673 = scmp.lt.s32.totalorder %s36, 1
        %s674 = scalar_select %p673, %s36, 1
        %s675 = smul.addr %s674, 8
        %s676 = smul.addr %s675, 8
        %s677 = scalar_lea.vmem %s11, %s676
        %p678 = scmp.lt.s32.totalorder %s36, 1
        %s679 = scalar_select %p678, %s36, 1
        %s680 = scalar_lea.vmem %s12, %s679
        %p681 = scmp.eq.s32.totalorder %s36, 0
        // Predicated region
        $region85: #{tpu_custom_call.1} parent=71 // pred_check
          %p682 = pneg %p681
        $region86: #{tpu_custom_call.1} parent=71 // pred_check_branch
          %684 = sbr.rel (%p682) target = $region88
        $region87: #{tpu_custom_call.1} parent=71 // pred_region
          %v685 = vld [vmem:[%s546] sm:$0xff]
          %v686 = vld [vmem:[%s546 + $0x8] sm:$0xff]
          %v687 = vld [vmem:[#allocation6] sm:$0xff]
          %v688 = vld [vmem:[#allocation6 + $0x8] sm:$0xff]
          %v689 = vadd.f32 %v685, %v687
          %v690 = vadd.f32 %v686, %v688
          %vm691 = vcmask 261120
          %692 = vst.msk [vmem:[#allocation2] sm:$0xff] %vm691, %v689
          %693 = vst.msk [vmem:[#allocation2 + $0x8] sm:$0xff] %vm691, %v690
        $region88: #{tpu_custom_call.1} parent=71 // pred_fallthru
          _
        %v694 = vld [vmem:[#allocation2] sm:$0xff]
        %v695 = vld [vmem:[#allocation2 + $0x8] sm:$0xff]
        %v696 = vld [vmem:[%s645] sm:$0x1]
        %v697 = vld [vmem:[%s558] sm:$0x1]
        %vm698 = vcmask 261120
        %v699 = vsel %vm698, %v694, 0.0
        %700 = vadd.xlane.f32.xlu0 %v699
        %v701 = vpop.xlane.xlu0 %700
        %v702 = vsel %vm698, %v695, 0.0
        %703 = vadd.xlane.f32.xlu0 %v702
        %v704 = vpop.xlane.xlu0 %703
        %v705 = vrcp.pop 32.0
        %v706 = vmul.f32 %v701, %v705
        %v707 = vmul.f32 %v704, %v705
        %v708 = vsub.f32 %v694, %v706
        %v709 = vsub.f32 %v695, %v707
        %v710 = vmul.f32 %v708, %v708
        %v711 = vmul.f32 %v709, %v709
        %v712 = vsel %vm698, %v710, 0.0
        %713 = vadd.xlane.f32.xlu0 %v712
        %v714 = vpop.xlane.xlu0 %713
        %v715 = vsel %vm698, %v711, 0.0
        %716 = vadd.xlane.f32.xlu0 %v715
        %v717 = vpop.xlane.xlu0 %716
        %v718 = vmul.f32 %v714, %v705
        %v719 = vmul.f32 %v717, %v705
        %v720 = vadd.f32 %v718, 1e-05
        %v721 = vadd.f32 %v719, 1e-05
        %v722 = vrsqrt.pop %v720
        %v723 = vrsqrt.pop %v721
        %v724 = vmul.f32 %v708, %v722
        %v725 = vmul.f32 %v709, %v723
        %v727 = vlaneseq
        %v728 = vshrl.u32 %v727, 7
        %v729 = vsub.s32 0, %v728
        %v730 = vrot.slane %v696, %v729
        %v732 = vmul.f32 %v724, %v730
        %v733 = vmul.f32 %v725, %v730
        %v735 = vlaneseq
        %v736 = vshrl.u32 %v735, 7
        %v737 = vsub.s32 0, %v736
        %v738 = vrot.slane %v697, %v737
        %v740 = vadd.f32 %v732, %v738
        %v741 = vadd.f32 %v733, %v738
        %v742 = vld [vmem:[%s650] sm:$0xff]
        %v743 = vld [vmem:[%s650 + $0x8] sm:$0xff]
        %v744 = vld [vmem:[%s650 + $0x10] sm:$0xff]
        %v745 = vld [vmem:[%s650 + $0x18] sm:$0xff]
        %v747 = vsel %vm698, %v740, 0
        %v750 = vsel %vm698, %v741, 0
        %752 = vmatprep.subr.mxu0 0.0
        %753 = vmatpush1.msra.mxu0 0.0
        %754 = vmatprep.subr.mxu0 0.0
        %755 = vmatpush1.msra.mxu0 0.0
        %756 = vmatprep.subr.mxu0 0.0
        %757 = vmatpush1.msra.mxu0 0.0
        %758 = vmatprep.subr.mxu0 0.0
        %759 = vmatpush1.msra.mxu0 0.0
        %760 = vmatprep.subr.mxu0 0.0
        %761 = vmatpush1.msra.mxu0 0.0
        %762 = vmatprep.subr.mxu0 0.0
        %763 = vmatpush1.msra.mxu0 0.0
        %764 = vmatprep.subr.mxu0 0.0
        %765 = vmatpush1.msra.mxu0 0.0
        %766 = vmatprep.subr.mxu0 0.0
        %767 = vmatpush1.msra.mxu0 0.0
        %768 = vmatprep.subr.mxu0 0.0
        %769 = vmatpush1.msra.mxu0 0.0
        %770 = vmatprep.subr.mxu0 0.0
        %771 = vmatpush1.msra.mxu0 0.0
        %772 = vmatprep.subr.mxu0 0.0
        %773 = vmatpush1.msra.mxu0 0.0
        %774 = vmatprep.subr.mxu0 0.0
        %775 = vmatpush1.msra.mxu0 0.0
        %776 = vmatprep.subr.mxu0 0.0
        %777 = vmatpush1.msra.mxu0 %v745
        %778 = vmatprep.subr.mxu0 0.0
        %779 = vmatpush1.msra.mxu0 %v744
        %780 = vmatprep.subr.mxu0 0.0
        %781 = vmatpush1.msra.mxu0 %v743
        %782 = vmatprep.subr.mxu0 0.0
        %783 = vmatpush1.msra.mxu0 %v742
        %784 = vmatprep.subr.mxu0 0.0
        %785 = vmatpush2.msra.mxu0 0.0
        %786 = vmatprep.subr.mxu0 0.0
        %787 = vmatpush2.msra.mxu0 0.0
        %788 = vmatprep.subr.mxu0 0.0
        %789 = vmatpush2.msra.mxu0 0.0
        %790 = vmatprep.subr.mxu0 0.0
        %791 = vmatpush2.msra.mxu0 0.0
        %792 = vmatprep.subr.mxu0 0.0
        %793 = vmatpush2.msra.mxu0 0.0
        %794 = vmatprep.subr.mxu0 0.0
        %795 = vmatpush2.msra.mxu0 0.0
        %796 = vmatprep.subr.mxu0 0.0
        %797 = vmatpush2.msra.mxu0 0.0
        %798 = vmatprep.subr.mxu0 0.0
        %799 = vmatpush2.msra.mxu0 0.0
        %800 = vmatprep.subr.mxu0 0.0
        %801 = vmatpush2.msra.mxu0 0.0
        %802 = vmatprep.subr.mxu0 0.0
        %803 = vmatpush2.msra.mxu0 0.0
        %804 = vmatprep.subr.mxu0 0.0
        %805 = vmatpush2.msra.mxu0 0.0
        %806 = vmatprep.subr.mxu0 0.0
        %807 = vmatpush2.msra.mxu0 0.0
        %808 = vmatprep.subr.mxu0 0.0
        %809 = vmatpush2.msra.mxu0 0.0
        %810 = vmatprep.subr.mxu0 0.0
        %811 = vmatpush2.msra.mxu0 0.0
        %812 = vmatprep.subr.mxu0 0.0
        %813 = vmatpush2.msra.mxu0 0.0
        %814 = vmatprep.subr.mxu0 0.0
        %815 = vmatpush2.msra.mxu0 0.0
        %816 = vmatprep.mubr.f32.mxu0 0.0
        %817 = vmatmul.mubr.f32.gmra.mxu0 %v747
        %v818 = vpop.f32.mrf.mxu0
        %v819 = vadd.f32 0.0, %v818
        %v820 = vpop.f32.mrf.mxu0
        %821 = vmatprep.mubr.f32.mxu0 0.0
        %822 = vmatmul.mubr.f32.gmra.mxu0 %v750
        %v823 = vpop.f32.mrf.mxu0
        %v824 = vadd.f32 0.0, %v823
        %v825 = vpop.f32.mrf.mxu0
        %826 = vdwg.mxu0
        %829 = vrot.lane.b32.xlu0 %v819, 96
        %v830 = vpop.permute.xlu0 %829
        %831 = vrot.lane.b32.xlu0 %v824, 96
        %v832 = vpop.permute.xlu0 %831
        %vm833 = vcmask 64512
        %v834 = vsel %vm833, %v819, 0
        %v836 = vsel %vm833, %v824, 0
        %v838 = vsel %vm833, %v830, 0
        %v840 = vsel %vm833, %v832, 0
        %842 = vmatprep.subr.mxu0 0.0
        %843 = vmatpush1.xpose.msra.mxu0 0.0
        %844 = vmatprep.subr.mxu0 0.0
        %845 = vmatpush1.xpose.msra.mxu0 0.0
        %846 = vmatprep.subr.mxu0 0.0
        %847 = vmatpush1.xpose.msra.mxu0 0.0
        %848 = vmatprep.subr.mxu0 0.0
        %849 = vmatpush1.xpose.msra.mxu0 0.0
        %850 = vmatprep.subr.mxu0 0.0
        %851 = vmatpush1.xpose.msra.mxu0 0.0
        %852 = vmatprep.subr.mxu0 0.0
        %853 = vmatpush1.xpose.msra.mxu0 0.0
        %854 = vmatprep.subr.mxu0 0.0
        %855 = vmatpush1.xpose.msra.mxu0 0.0
        %856 = vmatprep.subr.mxu0 0.0
        %857 = vmatpush1.xpose.msra.mxu0 0.0
        %858 = vmatprep.subr.mxu0 0.0
        %859 = vmatpush1.xpose.msra.mxu0 0.0
        %860 = vmatprep.subr.mxu0 0.0
        %861 = vmatpush1.xpose.msra.mxu0 0.0
        %862 = vmatprep.subr.mxu0 0.0
        %863 = vmatpush1.xpose.msra.mxu0 0.0
        %864 = vmatprep.subr.mxu0 0.0
        %865 = vmatpush1.xpose.msra.mxu0 0.0
        %866 = vmatprep.subr.mxu0 0.0
        %867 = vmatpush1.xpose.msra.mxu0 0.0
        %868 = vmatprep.subr.mxu0 0.0
        %869 = vmatpush1.xpose.msra.mxu0 0.0
        %870 = vmatprep.subr.mxu0 0.0
        %871 = vmatpush1.xpose.msra.mxu0 %v840
        %872 = vmatprep.subr.mxu0 0.0
        %873 = vmatpush1.xpose.msra.mxu0 %v838
        %874 = vmatprep.subr.mxu0 0.0
        %875 = vmatpush2.xpose.msra.mxu0 0.0
        %876 = vmatprep.subr.mxu0 0.0
        %877 = vmatpush2.xpose.msra.mxu0 0.0
        %878 = vmatprep.subr.mxu0 0.0
        %879 = vmatpush2.xpose.msra.mxu0 0.0
        %880 = vmatprep.subr.mxu0 0.0
        %881 = vmatpush2.xpose.msra.mxu0 0.0
        %882 = vmatprep.subr.mxu0 0.0
        %883 = vmatpush2.xpose.msra.mxu0 0.0
        %884 = vmatprep.subr.mxu0 0.0
        %885 = vmatpush2.xpose.msra.mxu0 0.0
        %886 = vmatprep.subr.mxu0 0.0
        %887 = vmatpush2.xpose.msra.mxu0 0.0
        %888 = vmatprep.subr.mxu0 0.0
        %889 = vmatpush2.xpose.msra.mxu0 0.0
        %890 = vmatprep.subr.mxu0 0.0
        %891 = vmatpush2.xpose.msra.mxu0 0.0
        %892 = vmatprep.subr.mxu0 0.0
        %893 = vmatpush2.xpose.msra.mxu0 0.0
        %894 = vmatprep.subr.mxu0 0.0
        %895 = vmatpush2.xpose.msra.mxu0 0.0
        %896 = vmatprep.subr.mxu0 0.0
        %897 = vmatpush2.xpose.msra.mxu0 0.0
        %898 = vmatprep.subr.mxu0 0.0
        %899 = vmatpush2.xpose.msra.mxu0 0.0
        %900 = vmatprep.subr.mxu0 0.0
        %901 = vmatpush2.xpose.msra.mxu0 0.0
        %902 = vmatprep.subr.mxu0 0.0
        %903 = vmatpush2.xpose.msra.mxu0 0.0
        %904 = vmatprep.subr.mxu0 0.0
        %905 = vmatpush2.xpose.msra.mxu0 0.0
        %906 = vmatprep.mubr.f32.mxu0 0.0
        %907 = vmatmul.mubr.f32.gmra.mxu0 %v834
        %v908 = vpop.f32.mrf.mxu0
        %v909 = vadd.f32 0.0, %v908
        %v910 = vpop.f32.mrf.mxu0
        %911 = vmatprep.mubr.f32.mxu0 0.0
        %912 = vmatmul.mubr.f32.gmra.mxu0 %v836
        %v913 = vpop.f32.mrf.mxu0
        %v914 = vadd.f32 0.0, %v913
        %v915 = vpop.f32.mrf.mxu0
        %916 = vdwg.mxu0
        %v917 = vmul.f32 %v909, 0.35355338
        %v918 = vmul.f32 %v914, 0.35355338
        %vm919 = vcmask 130048
        %v920 = vsel %vm919, %v917, -inf
        %921 = vmax.xlane.f32.xlu0 %v920
        %v922 = vpop.xlane.xlu0 %921
        %v923 = vsel %vm919, %v918, -inf
        %924 = vmax.xlane.f32.xlu0 %v923
        %v925 = vpop.xlane.xlu0 %924
        %v926 = vsub.f32 %v917, %v922
        %v927 = vsub.f32 %v918, %v925
        %v928 = vmul.f32 %v926, 1.442695
        %v929 = vpow.pop %v928
        %v930 = vmul.f32 %v927, 1.442695
        %v931 = vpow.pop %v930
        %v932 = vsel %vm919, %v929, 0.0
        %933 = vadd.xlane.f32.xlu0 %v932
        %v934 = vpop.xlane.xlu0 %933
        %v935 = vsel %vm919, %v931, 0.0
        %936 = vadd.xlane.f32.xlu0 %v935
        %v937 = vpop.xlane.xlu0 %936
        %v938 = vrcp.pop %v934
        %v939 = vmul.f32 %v929, %v938
        %v940 = vrcp.pop %v937
        %v941 = vmul.f32 %v931, %v940
        %942 = vrot.lane.b32.xlu0 %v819, 64
        %v943 = vpop.permute.xlu0 %942
        %944 = vrot.lane.b32.xlu0 %v824, 64
        %v945 = vpop.permute.xlu0 %944
        %v949 = vsel %vm919, %v939, 0
        %v952 = vsel %vm919, %v941, 0
        %954 = vmatprep.subr.mxu0 0.0
        %955 = vmatpush1.msra.mxu0 0.0
        %956 = vmatprep.subr.mxu0 0.0
        %957 = vmatpush1.msra.mxu0 0.0
        %958 = vmatprep.subr.mxu0 0.0
        %959 = vmatpush1.msra.mxu0 0.0
        %960 = vmatprep.subr.mxu0 0.0
        %961 = vmatpush1.msra.mxu0 0.0
        %962 = vmatprep.subr.mxu0 0.0
        %963 = vmatpush1.msra.mxu0 0.0
        %964 = vmatprep.subr.mxu0 0.0
        %965 = vmatpush1.msra.mxu0 0.0
        %966 = vmatprep.subr.mxu0 0.0
        %967 = vmatpush1.msra.mxu0 0.0
        %968 = vmatprep.subr.mxu0 0.0
        %969 = vmatpush1.msra.mxu0 0.0
        %970 = vmatprep.subr.mxu0 0.0
        %971 = vmatpush1.msra.mxu0 0.0
        %972 = vmatprep.subr.mxu0 0.0
        %973 = vmatpush1.msra.mxu0 0.0
        %974 = vmatprep.subr.mxu0 0.0
        %975 = vmatpush1.msra.mxu0 0.0
        %976 = vmatprep.subr.mxu0 0.0
        %977 = vmatpush1.msra.mxu0 0.0
        %978 = vmatprep.subr.mxu0 0.0
        %979 = vmatpush1.msra.mxu0 0.0
        %980 = vmatprep.subr.mxu0 0.0
        %981 = vmatpush1.msra.mxu0 0.0
        %982 = vmatprep.subr.mxu0 0.0
        %983 = vmatpush1.msra.mxu0 %v945
        %984 = vmatprep.subr.mxu0 0.0
        %985 = vmatpush1.msra.mxu0 %v943
        %986 = vmatprep.subr.mxu0 0.0
        %987 = vmatpush2.msra.mxu0 0.0
        %988 = vmatprep.subr.mxu0 0.0
        %989 = vmatpush2.msra.mxu0 0.0
        %990 = vmatprep.subr.mxu0 0.0
        %991 = vmatpush2.msra.mxu0 0.0
        %992 = vmatprep.subr.mxu0 0.0
        %993 = vmatpush2.msra.mxu0 0.0
        %994 = vmatprep.subr.mxu0 0.0
        %995 = vmatpush2.msra.mxu0 0.0
        %996 = vmatprep.subr.mxu0 0.0
        %997 = vmatpush2.msra.mxu0 0.0
        %998 = vmatprep.subr.mxu0 0.0
        %999 = vmatpush2.msra.mxu0 0.0
        %1000 = vmatprep.subr.mxu0 0.0
        %1001 = vmatpush2.msra.mxu0 0.0
        %1002 = vmatprep.subr.mxu0 0.0
        %1003 = vmatpush2.msra.mxu0 0.0
        %1004 = vmatprep.subr.mxu0 0.0
        %1005 = vmatpush2.msra.mxu0 0.0
        %1006 = vmatprep.subr.mxu0 0.0
        %1007 = vmatpush2.msra.mxu0 0.0
        %1008 = vmatprep.subr.mxu0 0.0
        %1009 = vmatpush2.msra.mxu0 0.0
        %1010 = vmatprep.subr.mxu0 0.0
        %1011 = vmatpush2.msra.mxu0 0.0
        %1012 = vmatprep.subr.mxu0 0.0
        %1013 = vmatpush2.msra.mxu0 0.0
        %1014 = vmatprep.subr.mxu0 0.0
        %1015 = vmatpush2.msra.mxu0 0.0
        %1016 = vmatprep.subr.mxu0 0.0
        %1017 = vmatpush2.msra.mxu0 0.0
        %1018 = vmatprep.mubr.f32.mxu0 0.0
        %1019 = vmatmul.mubr.f32.gmra.mxu0 %v949
        %v1020 = vpop.f32.mrf.mxu0
        %v1021 = vadd.f32 0.0, %v1020
        %v1022 = vpop.f32.mrf.mxu0
        %1023 = vmatprep.mubr.f32.mxu0 0.0
        %1024 = vmatmul.mubr.f32.gmra.mxu0 %v952
        %v1025 = vpop.f32.mrf.mxu0
        %v1026 = vadd.f32 0.0, %v1025
        %v1027 = vpop.f32.mrf.mxu0
        %1028 = vdwg.mxu0
        %v1029 = vld [vmem:[%s655] sm:$0xff]
        %1030 = vrot.lane.b32.xlu0 %v819, 120
        %v1031 = vpop.permute.xlu0 %1030
        %1032 = vrot.lane.b32.xlu0 %v824, 120
        %v1033 = vpop.permute.xlu0 %1032
        %1034 = vrot.lane.b32.xlu0 %v819, 88
        %v1035 = vpop.permute.xlu0 %1034
        %1036 = vrot.lane.b32.xlu0 %v824, 88
        %v1037 = vpop.permute.xlu0 %1036
        %v1038 = vsel %vm833, %v1031, 0
        %v1040 = vsel %vm833, %v1033, 0
        %v1042 = vsel %vm833, %v1035, 0
        %v1044 = vsel %vm833, %v1037, 0
        %1046 = vmatprep.subr.mxu0 0.0
        %1047 = vmatpush1.xpose.msra.mxu0 0.0
        %1048 = vmatprep.subr.mxu0 0.0
        %1049 = vmatpush1.xpose.msra.mxu0 0.0
        %1050 = vmatprep.subr.mxu0 0.0
        %1051 = vmatpush1.xpose.msra.mxu0 0.0
        %1052 = vmatprep.subr.mxu0 0.0
        %1053 = vmatpush1.xpose.msra.mxu0 0.0
        %1054 = vmatprep.subr.mxu0 0.0
        %1055 = vmatpush1.xpose.msra.mxu0 0.0
        %1056 = vmatprep.subr.mxu0 0.0
        %1057 = vmatpush1.xpose.msra.mxu0 0.0
        %1058 = vmatprep.subr.mxu0 0.0
        %1059 = vmatpush1.xpose.msra.mxu0 0.0
        %1060 = vmatprep.subr.mxu0 0.0
        %1061 = vmatpush1.xpose.msra.mxu0 0.0
        %1062 = vmatprep.subr.mxu0 0.0
        %1063 = vmatpush1.xpose.msra.mxu0 0.0
        %1064 = vmatprep.subr.mxu0 0.0
        %1065 = vmatpush1.xpose.msra.mxu0 0.0
        %1066 = vmatprep.subr.mxu0 0.0
        %1067 = vmatpush1.xpose.msra.mxu0 0.0
        %1068 = vmatprep.subr.mxu0 0.0
        %1069 = vmatpush1.xpose.msra.mxu0 0.0
        %1070 = vmatprep.subr.mxu0 0.0
        %1071 = vmatpush1.xpose.msra.mxu0 0.0
        %1072 = vmatprep.subr.mxu0 0.0
        %1073 = vmatpush1.xpose.msra.mxu0 0.0
        %1074 = vmatprep.subr.mxu0 0.0
        %1075 = vmatpush1.xpose.msra.mxu0 %v1044
        %1076 = vmatprep.subr.mxu0 0.0
        %1077 = vmatpush1.xpose.msra.mxu0 %v1042
        %1078 = vmatprep.subr.mxu0 0.0
        %1079 = vmatpush2.xpose.msra.mxu0 0.0
        %1080 = vmatprep.subr.mxu0 0.0
        %1081 = vmatpush2.xpose.msra.mxu0 0.0
        %1082 = vmatprep.subr.mxu0 0.0
        %1083 = vmatpush2.xpose.msra.mxu0 0.0
        %1084 = vmatprep.subr.mxu0 0.0
        %1085 = vmatpush2.xpose.msra.mxu0 0.0
        %1086 = vmatprep.subr.mxu0 0.0
        %1087 = vmatpush2.xpose.msra.mxu0 0.0
        %1088 = vmatprep.subr.mxu0 0.0
        %1089 = vmatpush2.xpose.msra.mxu0 0.0
        %1090 = vmatprep.subr.mxu0 0.0
        %1091 = vmatpush2.xpose.msra.mxu0 0.0
        %1092 = vmatprep.subr.mxu0 0.0
        %1093 = vmatpush2.xpose.msra.mxu0 0.0
        %1094 = vmatprep.subr.mxu0 0.0
        %1095 = vmatpush2.xpose.msra.mxu0 0.0
        %1096 = vmatprep.subr.mxu0 0.0
        %1097 = vmatpush2.xpose.msra.mxu0 0.0
        %1098 = vmatprep.subr.mxu0 0.0
        %1099 = vmatpush2.xpose.msra.mxu0 0.0
        %1100 = vmatprep.subr.mxu0 0.0
        %1101 = vmatpush2.xpose.msra.mxu0 0.0
        %1102 = vmatprep.subr.mxu0 0.0
        %1103 = vmatpush2.xpose.msra.mxu0 0.0
        %1104 = vmatprep.subr.mxu0 0.0
        %1105 = vmatpush2.xpose.msra.mxu0 0.0
        %1106 = vmatprep.subr.mxu0 0.0
        %1107 = vmatpush2.xpose.msra.mxu0 0.0
        %1108 = vmatprep.subr.mxu0 0.0
        %1109 = vmatpush2.xpose.msra.mxu0 0.0
        %1110 = vmatprep.mubr.f32.mxu0 0.0
        %1111 = vmatmul.mubr.f32.gmra.mxu0 %v1038
        %v1112 = vpop.f32.mrf.mxu0
        %v1113 = vadd.f32 0.0, %v1112
        %v1114 = vpop.f32.mrf.mxu0
        %1115 = vmatprep.mubr.f32.mxu0 0.0
        %1116 = vmatmul.mubr.f32.gmra.mxu0 %v1040
        %v1117 = vpop.f32.mrf.mxu0
        %v1118 = vadd.f32 0.0, %v1117
        %v1119 = vpop.f32.mrf.mxu0
        %1120 = vdwg.mxu0
        %v1121 = vmul.f32 %v1113, 0.35355338
        %v1122 = vmul.f32 %v1118, 0.35355338
        %v1123 = vsel %vm919, %v1121, -inf
        %1124 = vmax.xlane.f32.xlu0 %v1123
        %v1125 = vpop.xlane.xlu0 %1124
        %v1126 = vsel %vm919, %v1122, -inf
        %1127 = vmax.xlane.f32.xlu0 %v1126
        %v1128 = vpop.xlane.xlu0 %1127
        %v1129 = vsub.f32 %v1121, %v1125
        %v1130 = vsub.f32 %v1122, %v1128
        %v1131 = vmul.f32 %v1129, 1.442695
        %v1132 = vpow.pop %v1131
        %v1133 = vmul.f32 %v1130, 1.442695
        %v1134 = vpow.pop %v1133
        %v1135 = vsel %vm919, %v1132, 0.0
        %1136 = vadd.xlane.f32.xlu0 %v1135
        %v1137 = vpop.xlane.xlu0 %1136
        %v1138 = vsel %vm919, %v1134, 0.0
        %1139 = vadd.xlane.f32.xlu0 %v1138
        %v1140 = vpop.xlane.xlu0 %1139
        %v1141 = vrcp.pop %v1137
        %v1142 = vmul.f32 %v1132, %v1141
        %v1143 = vrcp.pop %v1140
        %v1144 = vmul.f32 %v1134, %v1143
        %1145 = vrot.lane.b32.xlu0 %v819, 56
        %v1146 = vpop.permute.xlu0 %1145
        %1147 = vrot.lane.b32.xlu0 %v824, 56
        %v1148 = vpop.permute.xlu0 %1147
        %v1152 = vsel %vm919, %v1142, 0
        %v1155 = vsel %vm919, %v1144, 0
        %1157 = vmatprep.subr.mxu0 0.0
        %1158 = vmatpush1.msra.mxu0 0.0
        %1159 = vmatprep.subr.mxu0 0.0
        %1160 = vmatpush1.msra.mxu0 0.0
        %1161 = vmatprep.subr.mxu0 0.0
        %1162 = vmatpush1.msra.mxu0 0.0
        %1163 = vmatprep.subr.mxu0 0.0
        %1164 = vmatpush1.msra.mxu0 0.0
        %1165 = vmatprep.subr.mxu0 0.0
        %1166 = vmatpush1.msra.mxu0 0.0
        %1167 = vmatprep.subr.mxu0 0.0
        %1168 = vmatpush1.msra.mxu0 0.0
        %1169 = vmatprep.subr.mxu0 0.0
        %1170 = vmatpush1.msra.mxu0 0.0
        %1171 = vmatprep.subr.mxu0 0.0
        %1172 = vmatpush1.msra.mxu0 0.0
        %1173 = vmatprep.subr.mxu0 0.0
        %1174 = vmatpush1.msra.mxu0 0.0
        %1175 = vmatprep.subr.mxu0 0.0
        %1176 = vmatpush1.msra.mxu0 0.0
        %1177 = vmatprep.subr.mxu0 0.0
        %1178 = vmatpush1.msra.mxu0 0.0
        %1179 = vmatprep.subr.mxu0 0.0
        %1180 = vmatpush1.msra.mxu0 0.0
        %1181 = vmatprep.subr.mxu0 0.0
        %1182 = vmatpush1.msra.mxu0 0.0
        %1183 = vmatprep.subr.mxu0 0.0
        %1184 = vmatpush1.msra.mxu0 0.0
        %1185 = vmatprep.subr.mxu0 0.0
        %1186 = vmatpush1.msra.mxu0 %v1148
        %1187 = vmatprep.subr.mxu0 0.0
        %1188 = vmatpush1.msra.mxu0 %v1146
        %1189 = vmatprep.subr.mxu0 0.0
        %1190 = vmatpush2.msra.mxu0 0.0
        %1191 = vmatprep.subr.mxu0 0.0
        %1192 = vmatpush2.msra.mxu0 0.0
        %1193 = vmatprep.subr.mxu0 0.0
        %1194 = vmatpush2.msra.mxu0 0.0
        %1195 = vmatprep.subr.mxu0 0.0
        %1196 = vmatpush2.msra.mxu0 0.0
        %1197 = vmatprep.subr.mxu0 0.0
        %1198 = vmatpush2.msra.mxu0 0.0
        %1199 = vmatprep.subr.mxu0 0.0
        %1200 = vmatpush2.msra.mxu0 0.0
        %1201 = vmatprep.subr.mxu0 0.0
        %1202 = vmatpush2.msra.mxu0 0.0
        %1203 = vmatprep.subr.mxu0 0.0
        %1204 = vmatpush2.msra.mxu0 0.0
        %1205 = vmatprep.subr.mxu0 0.0
        %1206 = vmatpush2.msra.mxu0 0.0
        %1207 = vmatprep.subr.mxu0 0.0
        %1208 = vmatpush2.msra.mxu0 0.0
        %1209 = vmatprep.subr.mxu0 0.0
        %1210 = vmatpush2.msra.mxu0 0.0
        %1211 = vmatprep.subr.mxu0 0.0
        %1212 = vmatpush2.msra.mxu0 0.0
        %1213 = vmatprep.subr.mxu0 0.0
        %1214 = vmatpush2.msra.mxu0 0.0
        %1215 = vmatprep.subr.mxu0 0.0
        %1216 = vmatpush2.msra.mxu0 0.0
        %1217 = vmatprep.subr.mxu0 0.0
        %1218 = vmatpush2.msra.mxu0 0.0
        %1219 = vmatprep.subr.mxu0 0.0
        %1220 = vmatpush2.msra.mxu0 0.0
        %1221 = vmatprep.mubr.f32.mxu0 0.0
        %1222 = vmatmul.mubr.f32.gmra.mxu0 %v1152
        %v1223 = vpop.f32.mrf.mxu0
        %v1224 = vadd.f32 0.0, %v1223
        %v1225 = vpop.f32.mrf.mxu0
        %1226 = vmatprep.mubr.f32.mxu0 0.0
        %1227 = vmatmul.mubr.f32.gmra.mxu0 %v1155
        %v1228 = vpop.f32.mrf.mxu0
        %v1229 = vadd.f32 0.0, %v1228
        %v1230 = vpop.f32.mrf.mxu0
        %1231 = vdwg.mxu0
        %v1232 = vld [vmem:[%s655 + $0x8] sm:$0xff]
        %v1234 = vsel %vm833, %v1224, 0
        %v1237 = vsel %vm833, %v1229, 0
        %1239 = vmatprep.subr.mxu0 0.0
        %1240 = vmatpush1.msra.mxu0 0.0
        %1241 = vmatprep.subr.mxu0 0.0
        %1242 = vmatpush1.msra.mxu0 0.0
        %1243 = vmatprep.subr.mxu0 0.0
        %1244 = vmatpush1.msra.mxu0 0.0
        %1245 = vmatprep.subr.mxu0 0.0
        %1246 = vmatpush1.msra.mxu0 0.0
        %1247 = vmatprep.subr.mxu0 0.0
        %1248 = vmatpush1.msra.mxu0 0.0
        %1249 = vmatprep.subr.mxu0 0.0
        %1250 = vmatpush1.msra.mxu0 0.0
        %1251 = vmatprep.subr.mxu0 0.0
        %1252 = vmatpush1.msra.mxu0 0.0
        %1253 = vmatprep.subr.mxu0 0.0
        %1254 = vmatpush1.msra.mxu0 0.0
        %1255 = vmatprep.subr.mxu0 0.0
        %1256 = vmatpush1.msra.mxu0 0.0
        %1257 = vmatprep.subr.mxu0 0.0
        %1258 = vmatpush1.msra.mxu0 0.0
        %1259 = vmatprep.subr.mxu0 0.0
        %1260 = vmatpush1.msra.mxu0 0.0
        %1261 = vmatprep.subr.mxu0 0.0
        %1262 = vmatpush1.msra.mxu0 0.0
        %1263 = vmatprep.subr.mxu0 0.0
        %1264 = vmatpush1.msra.mxu0 0.0
        %1265 = vmatprep.subr.mxu0 0.0
        %1266 = vmatpush1.msra.mxu0 0.0
        %1267 = vmatprep.subr.mxu0 0.0
        %1268 = vmatpush1.msra.mxu0 0.0
        %1269 = vmatprep.subr.mxu0 0.0
        %1270 = vmatpush1.msra.mxu0 %v1232
        %1271 = vmatprep.subr.mxu0 0.0
        %1272 = vmatpush2.msra.mxu0 0.0
        %1273 = vmatprep.subr.mxu0 0.0
        %1274 = vmatpush2.msra.mxu0 0.0
        %1275 = vmatprep.subr.mxu0 0.0
        %1276 = vmatpush2.msra.mxu0 0.0
        %1277 = vmatprep.subr.mxu0 0.0
        %1278 = vmatpush2.msra.mxu0 0.0
        %1279 = vmatprep.subr.mxu0 0.0
        %1280 = vmatpush2.msra.mxu0 0.0
        %1281 = vmatprep.subr.mxu0 0.0
        %1282 = vmatpush2.msra.mxu0 0.0
        %1283 = vmatprep.subr.mxu0 0.0
        %1284 = vmatpush2.msra.mxu0 0.0
        %1285 = vmatprep.subr.mxu0 0.0
        %1286 = vmatpush2.msra.mxu0 0.0
        %1287 = vmatprep.subr.mxu0 0.0
        %1288 = vmatpush2.msra.mxu0 0.0
        %1289 = vmatprep.subr.mxu0 0.0
        %1290 = vmatpush2.msra.mxu0 0.0
        %1291 = vmatprep.subr.mxu0 0.0
        %1292 = vmatpush2.msra.mxu0 0.0
        %1293 = vmatprep.subr.mxu0 0.0
        %1294 = vmatpush2.msra.mxu0 0.0
        %1295 = vmatprep.subr.mxu0 0.0
        %1296 = vmatpush2.msra.mxu0 0.0
        %1297 = vmatprep.subr.mxu0 0.0
        %1298 = vmatpush2.msra.mxu0 0.0
        %1299 = vmatprep.subr.mxu0 0.0
        %1300 = vmatpush2.msra.mxu0 0.0
        %1301 = vmatprep.subr.mxu0 0.0
        %1302 = vmatpush2.msra.mxu0 0.0
        %1303 = vmatprep.mubr.f32.mxu0 0.0
        %1304 = vmatmul.mubr.f32.gmra.mxu0 %v1234
        %v1305 = vpop.f32.mrf.mxu0
        %v1306 = vadd.f32 0.0, %v1305
        %v1307 = vpop.f32.mrf.mxu0
        %1308 = vmatprep.mubr.f32.mxu0 0.0
        %1309 = vmatmul.mubr.f32.gmra.mxu0 %v1237
        %v1310 = vpop.f32.mrf.mxu0
        %v1311 = vadd.f32 0.0, %v1310
        %v1312 = vpop.f32.mrf.mxu0
        %1313 = vdwg.mxu0
        %v1315 = vsel %vm833, %v1021, 0
        %v1318 = vsel %vm833, %v1026, 0
        %1320 = vmatprep.subr.mxu0 0.0
        %1321 = vmatpush1.msra.mxu0 0.0
        %1322 = vmatprep.subr.mxu0 0.0
        %1323 = vmatpush1.msra.mxu0 0.0
        %1324 = vmatprep.subr.mxu0 0.0
        %1325 = vmatpush1.msra.mxu0 0.0
        %1326 = vmatprep.subr.mxu0 0.0
        %1327 = vmatpush1.msra.mxu0 0.0
        %1328 = vmatprep.subr.mxu0 0.0
        %1329 = vmatpush1.msra.mxu0 0.0
        %1330 = vmatprep.subr.mxu0 0.0
        %1331 = vmatpush1.msra.mxu0 0.0
        %1332 = vmatprep.subr.mxu0 0.0
        %1333 = vmatpush1.msra.mxu0 0.0
        %1334 = vmatprep.subr.mxu0 0.0
        %1335 = vmatpush1.msra.mxu0 0.0
        %1336 = vmatprep.subr.mxu0 0.0
        %1337 = vmatpush1.msra.mxu0 0.0
        %1338 = vmatprep.subr.mxu0 0.0
        %1339 = vmatpush1.msra.mxu0 0.0
        %1340 = vmatprep.subr.mxu0 0.0
        %1341 = vmatpush1.msra.mxu0 0.0
        %1342 = vmatprep.subr.mxu0 0.0
        %1343 = vmatpush1.msra.mxu0 0.0
        %1344 = vmatprep.subr.mxu0 0.0
        %1345 = vmatpush1.msra.mxu0 0.0
        %1346 = vmatprep.subr.mxu0 0.0
        %1347 = vmatpush1.msra.mxu0 0.0
        %1348 = vmatprep.subr.mxu0 0.0
        %1349 = vmatpush1.msra.mxu0 0.0
        %1350 = vmatprep.subr.mxu0 0.0
        %1351 = vmatpush1.msra.mxu0 %v1029
        %1352 = vmatprep.subr.mxu0 0.0
        %1353 = vmatpush2.msra.mxu0 0.0
        %1354 = vmatprep.subr.mxu0 0.0
        %1355 = vmatpush2.msra.mxu0 0.0
        %1356 = vmatprep.subr.mxu0 0.0
        %1357 = vmatpush2.msra.mxu0 0.0
        %1358 = vmatprep.subr.mxu0 0.0
        %1359 = vmatpush2.msra.mxu0 0.0
        %1360 = vmatprep.subr.mxu0 0.0
        %1361 = vmatpush2.msra.mxu0 0.0
        %1362 = vmatprep.subr.mxu0 0.0
        %1363 = vmatpush2.msra.mxu0 0.0
        %1364 = vmatprep.subr.mxu0 0.0
        %1365 = vmatpush2.msra.mxu0 0.0
        %1366 = vmatprep.subr.mxu0 0.0
        %1367 = vmatpush2.msra.mxu0 0.0
        %1368 = vmatprep.subr.mxu0 0.0
        %1369 = vmatpush2.msra.mxu0 0.0
        %1370 = vmatprep.subr.mxu0 0.0
        %1371 = vmatpush2.msra.mxu0 0.0
        %1372 = vmatprep.subr.mxu0 0.0
        %1373 = vmatpush2.msra.mxu0 0.0
        %1374 = vmatprep.subr.mxu0 0.0
        %1375 = vmatpush2.msra.mxu0 0.0
        %1376 = vmatprep.subr.mxu0 0.0
        %1377 = vmatpush2.msra.mxu0 0.0
        %1378 = vmatprep.subr.mxu0 0.0
        %1379 = vmatpush2.msra.mxu0 0.0
        %1380 = vmatprep.subr.mxu0 0.0
        %1381 = vmatpush2.msra.mxu0 0.0
        %1382 = vmatprep.subr.mxu0 0.0
        %1383 = vmatpush2.msra.mxu0 0.0
        %1384 = vmatprep.mubr.f32.mxu0 0.0
        %1385 = vmatmul.mubr.f32.gmra.mxu0 %v1315
        %v1386 = vpop.f32.mrf.mxu0
        %v1387 = vadd.f32 %v1306, %v1386
        %v1388 = vpop.f32.mrf.mxu0
        %1389 = vmatprep.mubr.f32.mxu0 0.0
        %1390 = vmatmul.mubr.f32.gmra.mxu0 %v1318
        %v1391 = vpop.f32.mrf.mxu0
        %v1392 = vadd.f32 %v1311, %v1391
        %v1393 = vpop.f32.mrf.mxu0
        %1394 = vdwg.mxu0
        %1395 = vrot.lane.b32.xlu0 %v819, 112
        %v1396 = vpop.permute.xlu0 %1395
        %1397 = vrot.lane.b32.xlu0 %v824, 112
        %v1398 = vpop.permute.xlu0 %1397
        %1399 = vrot.lane.b32.xlu0 %v819, 80
        %v1400 = vpop.permute.xlu0 %1399
        %1401 = vrot.lane.b32.xlu0 %v824, 80
        %v1402 = vpop.permute.xlu0 %1401
        %v1403 = vsel %vm833, %v1396, 0
        %v1405 = vsel %vm833, %v1398, 0
        %v1407 = vsel %vm833, %v1400, 0
        %v1409 = vsel %vm833, %v1402, 0
        %1411 = vmatprep.subr.mxu0 0.0
        %1412 = vmatpush1.xpose.msra.mxu0 0.0
        %1413 = vmatprep.subr.mxu0 0.0
        %1414 = vmatpush1.xpose.msra.mxu0 0.0
        %1415 = vmatprep.subr.mxu0 0.0
        %1416 = vmatpush1.xpose.msra.mxu0 0.0
        %1417 = vmatprep.subr.mxu0 0.0
        %1418 = vmatpush1.xpose.msra.mxu0 0.0
        %1419 = vmatprep.subr.mxu0 0.0
        %1420 = vmatpush1.xpose.msra.mxu0 0.0
        %1421 = vmatprep.subr.mxu0 0.0
        %1422 = vmatpush1.xpose.msra.mxu0 0.0
        %1423 = vmatprep.subr.mxu0 0.0
        %1424 = vmatpush1.xpose.msra.mxu0 0.0
        %1425 = vmatprep.subr.mxu0 0.0
        %1426 = vmatpush1.xpose.msra.mxu0 0.0
        %1427 = vmatprep.subr.mxu0 0.0
        %1428 = vmatpush1.xpose.msra.mxu0 0.0
        %1429 = vmatprep.subr.mxu0 0.0
        %1430 = vmatpush1.xpose.msra.mxu0 0.0
        %1431 = vmatprep.subr.mxu0 0.0
        %1432 = vmatpush1.xpose.msra.mxu0 0.0
        %1433 = vmatprep.subr.mxu0 0.0
        %1434 = vmatpush1.xpose.msra.mxu0 0.0
        %1435 = vmatprep.subr.mxu0 0.0
        %1436 = vmatpush1.xpose.msra.mxu0 0.0
        %1437 = vmatprep.subr.mxu0 0.0
        %1438 = vmatpush1.xpose.msra.mxu0 0.0
        %1439 = vmatprep.subr.mxu0 0.0
        %1440 = vmatpush1.xpose.msra.mxu0 %v1409
        %1441 = vmatprep.subr.mxu0 0.0
        %1442 = vmatpush1.xpose.msra.mxu0 %v1407
        %1443 = vmatprep.subr.mxu0 0.0
        %1444 = vmatpush2.xpose.msra.mxu0 0.0
        %1445 = vmatprep.subr.mxu0 0.0
        %1446 = vmatpush2.xpose.msra.mxu0 0.0
        %1447 = vmatprep.subr.mxu0 0.0
        %1448 = vmatpush2.xpose.msra.mxu0 0.0
        %1449 = vmatprep.subr.mxu0 0.0
        %1450 = vmatpush2.xpose.msra.mxu0 0.0
        %1451 = vmatprep.subr.mxu0 0.0
        %1452 = vmatpush2.xpose.msra.mxu0 0.0
        %1453 = vmatprep.subr.mxu0 0.0
        %1454 = vmatpush2.xpose.msra.mxu0 0.0
        %1455 = vmatprep.subr.mxu0 0.0
        %1456 = vmatpush2.xpose.msra.mxu0 0.0
        %1457 = vmatprep.subr.mxu0 0.0
        %1458 = vmatpush2.xpose.msra.mxu0 0.0
        %1459 = vmatprep.subr.mxu0 0.0
        %1460 = vmatpush2.xpose.msra.mxu0 0.0
        %1461 = vmatprep.subr.mxu0 0.0
        %1462 = vmatpush2.xpose.msra.mxu0 0.0
        %1463 = vmatprep.subr.mxu0 0.0
        %1464 = vmatpush2.xpose.msra.mxu0 0.0
        %1465 = vmatprep.subr.mxu0 0.0
        %1466 = vmatpush2.xpose.msra.mxu0 0.0
        %1467 = vmatprep.subr.mxu0 0.0
        %1468 = vmatpush2.xpose.msra.mxu0 0.0
        %1469 = vmatprep.subr.mxu0 0.0
        %1470 = vmatpush2.xpose.msra.mxu0 0.0
        %1471 = vmatprep.subr.mxu0 0.0
        %1472 = vmatpush2.xpose.msra.mxu0 0.0
        %1473 = vmatprep.subr.mxu0 0.0
        %1474 = vmatpush2.xpose.msra.mxu0 0.0
        %1475 = vmatprep.mubr.f32.mxu0 0.0
        %1476 = vmatmul.mubr.f32.gmra.mxu0 %v1403
        %v1477 = vpop.f32.mrf.mxu0
        %v1478 = vadd.f32 0.0, %v1477
        %v1479 = vpop.f32.mrf.mxu0
        %1480 = vmatprep.mubr.f32.mxu0 0.0
        %1481 = vmatmul.mubr.f32.gmra.mxu0 %v1405
        %v1482 = vpop.f32.mrf.mxu0
        %v1483 = vadd.f32 0.0, %v1482
        %v1484 = vpop.f32.mrf.mxu0
        %1485 = vdwg.mxu0
        %v1486 = vmul.f32 %v1478, 0.35355338
        %v1487 = vmul.f32 %v1483, 0.35355338
        %v1488 = vsel %vm919, %v1486, -inf
        %1489 = vmax.xlane.f32.xlu0 %v1488
        %v1490 = vpop.xlane.xlu0 %1489
        %v1491 = vsel %vm919, %v1487, -inf
        %1492 = vmax.xlane.f32.xlu0 %v1491
        %v1493 = vpop.xlane.xlu0 %1492
        %v1494 = vsub.f32 %v1486, %v1490
        %v1495 = vsub.f32 %v1487, %v1493
        %v1496 = vmul.f32 %v1494, 1.442695
        %v1497 = vpow.pop %v1496
        %v1498 = vmul.f32 %v1495, 1.442695
        %v1499 = vpow.pop %v1498
        %v1500 = vsel %vm919, %v1497, 0.0
        %1501 = vadd.xlane.f32.xlu0 %v1500
        %v1502 = vpop.xlane.xlu0 %1501
        %v1503 = vsel %vm919, %v1499, 0.0
        %1504 = vadd.xlane.f32.xlu0 %v1503
        %v1505 = vpop.xlane.xlu0 %1504
        %v1506 = vrcp.pop %v1502
        %v1507 = vmul.f32 %v1497, %v1506
        %v1508 = vrcp.pop %v1505
        %v1509 = vmul.f32 %v1499, %v1508
        %1510 = vrot.lane.b32.xlu0 %v819, 48
        %v1511 = vpop.permute.xlu0 %1510
        %1512 = vrot.lane.b32.xlu0 %v824, 48
        %v1513 = vpop.permute.xlu0 %1512
        %v1517 = vsel %vm919, %v1507, 0
        %v1520 = vsel %vm919, %v1509, 0
        %1522 = vmatprep.subr.mxu0 0.0
        %1523 = vmatpush1.msra.mxu0 0.0
        %1524 = vmatprep.subr.mxu0 0.0
        %1525 = vmatpush1.msra.mxu0 0.0
        %1526 = vmatprep.subr.mxu0 0.0
        %1527 = vmatpush1.msra.mxu0 0.0
        %1528 = vmatprep.subr.mxu0 0.0
        %1529 = vmatpush1.msra.mxu0 0.0
        %1530 = vmatprep.subr.mxu0 0.0
        %1531 = vmatpush1.msra.mxu0 0.0
        %1532 = vmatprep.subr.mxu0 0.0
        %1533 = vmatpush1.msra.mxu0 0.0
        %1534 = vmatprep.subr.mxu0 0.0
        %1535 = vmatpush1.msra.mxu0 0.0
        %1536 = vmatprep.subr.mxu0 0.0
        %1537 = vmatpush1.msra.mxu0 0.0
        %1538 = vmatprep.subr.mxu0 0.0
        %1539 = vmatpush1.msra.mxu0 0.0
        %1540 = vmatprep.subr.mxu0 0.0
        %1541 = vmatpush1.msra.mxu0 0.0
        %1542 = vmatprep.subr.mxu0 0.0
        %1543 = vmatpush1.msra.mxu0 0.0
        %1544 = vmatprep.subr.mxu0 0.0
        %1545 = vmatpush1.msra.mxu0 0.0
        %1546 = vmatprep.subr.mxu0 0.0
        %1547 = vmatpush1.msra.mxu0 0.0
        %1548 = vmatprep.subr.mxu0 0.0
        %1549 = vmatpush1.msra.mxu0 0.0
        %1550 = vmatprep.subr.mxu0 0.0
        %1551 = vmatpush1.msra.mxu0 %v1513
        %1552 = vmatprep.subr.mxu0 0.0
        %1553 = vmatpush1.msra.mxu0 %v1511
        %1554 = vmatprep.subr.mxu0 0.0
        %1555 = vmatpush2.msra.mxu0 0.0
        %1556 = vmatprep.subr.mxu0 0.0
        %1557 = vmatpush2.msra.mxu0 0.0
        %1558 = vmatprep.subr.mxu0 0.0
        %1559 = vmatpush2.msra.mxu0 0.0
        %1560 = vmatprep.subr.mxu0 0.0
        %1561 = vmatpush2.msra.mxu0 0.0
        %1562 = vmatprep.subr.mxu0 0.0
        %1563 = vmatpush2.msra.mxu0 0.0
        %1564 = vmatprep.subr.mxu0 0.0
        %1565 = vmatpush2.msra.mxu0 0.0
        %1566 = vmatprep.subr.mxu0 0.0
        %1567 = vmatpush2.msra.mxu0 0.0
        %1568 = vmatprep.subr.mxu0 0.0
        %1569 = vmatpush2.msra.mxu0 0.0
        %1570 = vmatprep.subr.mxu0 0.0
        %1571 = vmatpush2.msra.mxu0 0.0
        %1572 = vmatprep.subr.mxu0 0.0
        %1573 = vmatpush2.msra.mxu0 0.0
        %1574 = vmatprep.subr.mxu0 0.0
        %1575 = vmatpush2.msra.mxu0 0.0
        %1576 = vmatprep.subr.mxu0 0.0
        %1577 = vmatpush2.msra.mxu0 0.0
        %1578 = vmatprep.subr.mxu0 0.0
        %1579 = vmatpush2.msra.mxu0 0.0
        %1580 = vmatprep.subr.mxu0 0.0
        %1581 = vmatpush2.msra.mxu0 0.0
        %1582 = vmatprep.subr.mxu0 0.0
        %1583 = vmatpush2.msra.mxu0 0.0
        %1584 = vmatprep.subr.mxu0 0.0
        %1585 = vmatpush2.msra.mxu0 0.0
        %1586 = vmatprep.mubr.f32.mxu0 0.0
        %1587 = vmatmul.mubr.f32.gmra.mxu0 %v1517
        %v1588 = vpop.f32.mrf.mxu0
        %v1589 = vadd.f32 0.0, %v1588
        %v1590 = vpop.f32.mrf.mxu0
        %1591 = vmatprep.mubr.f32.mxu0 0.0
        %1592 = vmatmul.mubr.f32.gmra.mxu0 %v1520
        %v1593 = vpop.f32.mrf.mxu0
        %v1594 = vadd.f32 0.0, %v1593
        %v1595 = vpop.f32.mrf.mxu0
        %1596 = vdwg.mxu0
        %v1597 = vld [vmem:[%s655 + $0x10] sm:$0xff]
        %v1599 = vsel %vm833, %v1589, 0
        %v1602 = vsel %vm833, %v1594, 0
        %1604 = vmatprep.subr.mxu0 0.0
        %1605 = vmatpush1.msra.mxu0 0.0
        %1606 = vmatprep.subr.mxu0 0.0
        %1607 = vmatpush1.msra.mxu0 0.0
        %1608 = vmatprep.subr.mxu0 0.0
        %1609 = vmatpush1.msra.mxu0 0.0
        %1610 = vmatprep.subr.mxu0 0.0
        %1611 = vmatpush1.msra.mxu0 0.0
        %1612 = vmatprep.subr.mxu0 0.0
        %1613 = vmatpush1.msra.mxu0 0.0
        %1614 = vmatprep.subr.mxu0 0.0
        %1615 = vmatpush1.msra.mxu0 0.0
        %1616 = vmatprep.subr.mxu0 0.0
        %1617 = vmatpush1.msra.mxu0 0.0
        %1618 = vmatprep.subr.mxu0 0.0
        %1619 = vmatpush1.msra.mxu0 0.0
        %1620 = vmatprep.subr.mxu0 0.0
        %1621 = vmatpush1.msra.mxu0 0.0
        %1622 = vmatprep.subr.mxu0 0.0
        %1623 = vmatpush1.msra.mxu0 0.0
        %1624 = vmatprep.subr.mxu0 0.0
        %1625 = vmatpush1.msra.mxu0 0.0
        %1626 = vmatprep.subr.mxu0 0.0
        %1627 = vmatpush1.msra.mxu0 0.0
        %1628 = vmatprep.subr.mxu0 0.0
        %1629 = vmatpush1.msra.mxu0 0.0
        %1630 = vmatprep.subr.mxu0 0.0
        %1631 = vmatpush1.msra.mxu0 0.0
        %1632 = vmatprep.subr.mxu0 0.0
        %1633 = vmatpush1.msra.mxu0 0.0
        %1634 = vmatprep.subr.mxu0 0.0
        %1635 = vmatpush1.msra.mxu0 %v1597
        %1636 = vmatprep.subr.mxu0 0.0
        %1637 = vmatpush2.msra.mxu0 0.0
        %1638 = vmatprep.subr.mxu0 0.0
        %1639 = vmatpush2.msra.mxu0 0.0
        %1640 = vmatprep.subr.mxu0 0.0
        %1641 = vmatpush2.msra.mxu0 0.0
        %1642 = vmatprep.subr.mxu0 0.0
        %1643 = vmatpush2.msra.mxu0 0.0
        %1644 = vmatprep.subr.mxu0 0.0
        %1645 = vmatpush2.msra.mxu0 0.0
        %1646 = vmatprep.subr.mxu0 0.0
        %1647 = vmatpush2.msra.mxu0 0.0
        %1648 = vmatprep.subr.mxu0 0.0
        %1649 = vmatpush2.msra.mxu0 0.0
        %1650 = vmatprep.subr.mxu0 0.0
        %1651 = vmatpush2.msra.mxu0 0.0
        %1652 = vmatprep.subr.mxu0 0.0
        %1653 = vmatpush2.msra.mxu0 0.0
        %1654 = vmatprep.subr.mxu0 0.0
        %1655 = vmatpush2.msra.mxu0 0.0
        %1656 = vmatprep.subr.mxu0 0.0
        %1657 = vmatpush2.msra.mxu0 0.0
        %1658 = vmatprep.subr.mxu0 0.0
        %1659 = vmatpush2.msra.mxu0 0.0
        %1660 = vmatprep.subr.mxu0 0.0
        %1661 = vmatpush2.msra.mxu0 0.0
        %1662 = vmatprep.subr.mxu0 0.0
        %1663 = vmatpush2.msra.mxu0 0.0
        %1664 = vmatprep.subr.mxu0 0.0
        %1665 = vmatpush2.msra.mxu0 0.0
        %1666 = vmatprep.subr.mxu0 0.0
        %1667 = vmatpush2.msra.mxu0 0.0
        %1668 = vmatprep.mubr.f32.mxu0 0.0
        %1669 = vmatmul.mubr.f32.gmra.mxu0 %v1599
        %v1670 = vpop.f32.mrf.mxu0
        %v1671 = vadd.f32 0.0, %v1670
        %v1672 = vpop.f32.mrf.mxu0
        %1673 = vmatprep.mubr.f32.mxu0 0.0
        %1674 = vmatmul.mubr.f32.gmra.mxu0 %v1602
        %v1675 = vpop.f32.mrf.mxu0
        %v1676 = vadd.f32 0.0, %v1675
        %v1677 = vpop.f32.mrf.mxu0
        %1678 = vdwg.mxu0
        %v1679 = vadd.f32 %v1387, %v1671
        %v1680 = vadd.f32 %v1392, %v1676
        %1681 = vrot.lane.b32.xlu0 %v819, 104
        %v1682 = vpop.permute.xlu0 %1681
        %1683 = vrot.lane.b32.xlu0 %v824, 104
        %v1684 = vpop.permute.xlu0 %1683
        %1685 = vrot.lane.b32.xlu0 %v819, 72
        %v1686 = vpop.permute.xlu0 %1685
        %1687 = vrot.lane.b32.xlu0 %v824, 72
        %v1688 = vpop.permute.xlu0 %1687
        %v1689 = vsel %vm833, %v1682, 0
        %v1691 = vsel %vm833, %v1684, 0
        %v1693 = vsel %vm833, %v1686, 0
        %v1695 = vsel %vm833, %v1688, 0
        %1697 = vmatprep.subr.mxu0 0.0
        %1698 = vmatpush1.xpose.msra.mxu0 0.0
        %1699 = vmatprep.subr.mxu0 0.0
        %1700 = vmatpush1.xpose.msra.mxu0 0.0
        %1701 = vmatprep.subr.mxu0 0.0
        %1702 = vmatpush1.xpose.msra.mxu0 0.0
        %1703 = vmatprep.subr.mxu0 0.0
        %1704 = vmatpush1.xpose.msra.mxu0 0.0
        %1705 = vmatprep.subr.mxu0 0.0
        %1706 = vmatpush1.xpose.msra.mxu0 0.0
        %1707 = vmatprep.subr.mxu0 0.0
        %1708 = vmatpush1.xpose.msra.mxu0 0.0
        %1709 = vmatprep.subr.mxu0 0.0
        %1710 = vmatpush1.xpose.msra.mxu0 0.0
        %1711 = vmatprep.subr.mxu0 0.0
        %1712 = vmatpush1.xpose.msra.mxu0 0.0
        %1713 = vmatprep.subr.mxu0 0.0
        %1714 = vmatpush1.xpose.msra.mxu0 0.0
        %1715 = vmatprep.subr.mxu0 0.0
        %1716 = vmatpush1.xpose.msra.mxu0 0.0
        %1717 = vmatprep.subr.mxu0 0.0
        %1718 = vmatpush1.xpose.msra.mxu0 0.0
        %1719 = vmatprep.subr.mxu0 0.0
        %1720 = vmatpush1.xpose.msra.mxu0 0.0
        %1721 = vmatprep.subr.mxu0 0.0
        %1722 = vmatpush1.xpose.msra.mxu0 0.0
        %1723 = vmatprep.subr.mxu0 0.0
        %1724 = vmatpush1.xpose.msra.mxu0 0.0
        %1725 = vmatprep.subr.mxu0 0.0
        %1726 = vmatpush1.xpose.msra.mxu0 %v1695
        %1727 = vmatprep.subr.mxu0 0.0
        %1728 = vmatpush1.xpose.msra.mxu0 %v1693
        %1729 = vmatprep.subr.mxu0 0.0
        %1730 = vmatpush2.xpose.msra.mxu0 0.0
        %1731 = vmatprep.subr.mxu0 0.0
        %1732 = vmatpush2.xpose.msra.mxu0 0.0
        %1733 = vmatprep.subr.mxu0 0.0
        %1734 = vmatpush2.xpose.msra.mxu0 0.0
        %1735 = vmatprep.subr.mxu0 0.0
        %1736 = vmatpush2.xpose.msra.mxu0 0.0
        %1737 = vmatprep.subr.mxu0 0.0
        %1738 = vmatpush2.xpose.msra.mxu0 0.0
        %1739 = vmatprep.subr.mxu0 0.0
        %1740 = vmatpush2.xpose.msra.mxu0 0.0
        %1741 = vmatprep.subr.mxu0 0.0
        %1742 = vmatpush2.xpose.msra.mxu0 0.0
        %1743 = vmatprep.subr.mxu0 0.0
        %1744 = vmatpush2.xpose.msra.mxu0 0.0
        %1745 = vmatprep.subr.mxu0 0.0
        %1746 = vmatpush2.xpose.msra.mxu0 0.0
        %1747 = vmatprep.subr.mxu0 0.0
        %1748 = vmatpush2.xpose.msra.mxu0 0.0
        %1749 = vmatprep.subr.mxu0 0.0
        %1750 = vmatpush2.xpose.msra.mxu0 0.0
        %1751 = vmatprep.subr.mxu0 0.0
        %1752 = vmatpush2.xpose.msra.mxu0 0.0
        %1753 = vmatprep.subr.mxu0 0.0
        %1754 = vmatpush2.xpose.msra.mxu0 0.0
        %1755 = vmatprep.subr.mxu0 0.0
        %1756 = vmatpush2.xpose.msra.mxu0 0.0
        %1757 = vmatprep.subr.mxu0 0.0
        %1758 = vmatpush2.xpose.msra.mxu0 0.0
        %1759 = vmatprep.subr.mxu0 0.0
        %1760 = vmatpush2.xpose.msra.mxu0 0.0
        %1761 = vmatprep.mubr.f32.mxu0 0.0
        %1762 = vmatmul.mubr.f32.gmra.mxu0 %v1689
        %v1763 = vpop.f32.mrf.mxu0
        %v1764 = vadd.f32 0.0, %v1763
        %v1765 = vpop.f32.mrf.mxu0
        %1766 = vmatprep.mubr.f32.mxu0 0.0
        %1767 = vmatmul.mubr.f32.gmra.mxu0 %v1691
        %v1768 = vpop.f32.mrf.mxu0
        %v1769 = vadd.f32 0.0, %v1768
        %v1770 = vpop.f32.mrf.mxu0
        %1771 = vdwg.mxu0
        %v1772 = vmul.f32 %v1764, 0.35355338
        %v1773 = vmul.f32 %v1769, 0.35355338
        %v1774 = vsel %vm919, %v1772, -inf
        %1775 = vmax.xlane.f32.xlu0 %v1774
        %v1776 = vpop.xlane.xlu0 %1775
        %v1777 = vsel %vm919, %v1773, -inf
        %1778 = vmax.xlane.f32.xlu0 %v1777
        %v1779 = vpop.xlane.xlu0 %1778
        %v1780 = vsub.f32 %v1772, %v1776
        %v1781 = vsub.f32 %v1773, %v1779
        %v1782 = vmul.f32 %v1780, 1.442695
        %v1783 = vpow.pop %v1782
        %v1784 = vmul.f32 %v1781, 1.442695
        %v1785 = vpow.pop %v1784
        %v1786 = vsel %vm919, %v1783, 0.0
        %1787 = vadd.xlane.f32.xlu0 %v1786
        %v1788 = vpop.xlane.xlu0 %1787
        %v1789 = vsel %vm919, %v1785, 0.0
        %1790 = vadd.xlane.f32.xlu0 %v1789
        %v1791 = vpop.xlane.xlu0 %1790
        %v1792 = vrcp.pop %v1788
        %v1793 = vmul.f32 %v1783, %v1792
        %v1794 = vrcp.pop %v1791
        %v1795 = vmul.f32 %v1785, %v1794
        %1796 = vrot.lane.b32.xlu0 %v819, 40
        %v1797 = vpop.permute.xlu0 %1796
        %1798 = vrot.lane.b32.xlu0 %v824, 40
        %v1799 = vpop.permute.xlu0 %1798
        %v1803 = vsel %vm919, %v1793, 0
        %v1806 = vsel %vm919, %v1795, 0
        %1808 = vmatprep.subr.mxu0 0.0
        %1809 = vmatpush1.msra.mxu0 0.0
        %1810 = vmatprep.subr.mxu0 0.0
        %1811 = vmatpush1.msra.mxu0 0.0
        %1812 = vmatprep.subr.mxu0 0.0
        %1813 = vmatpush1.msra.mxu0 0.0
        %1814 = vmatprep.subr.mxu0 0.0
        %1815 = vmatpush1.msra.mxu0 0.0
        %1816 = vmatprep.subr.mxu0 0.0
        %1817 = vmatpush1.msra.mxu0 0.0
        %1818 = vmatprep.subr.mxu0 0.0
        %1819 = vmatpush1.msra.mxu0 0.0
        %1820 = vmatprep.subr.mxu0 0.0
        %1821 = vmatpush1.msra.mxu0 0.0
        %1822 = vmatprep.subr.mxu0 0.0
        %1823 = vmatpush1.msra.mxu0 0.0
        %1824 = vmatprep.subr.mxu0 0.0
        %1825 = vmatpush1.msra.mxu0 0.0
        %1826 = vmatprep.subr.mxu0 0.0
        %1827 = vmatpush1.msra.mxu0 0.0
        %1828 = vmatprep.subr.mxu0 0.0
        %1829 = vmatpush1.msra.mxu0 0.0
        %1830 = vmatprep.subr.mxu0 0.0
        %1831 = vmatpush1.msra.mxu0 0.0
        %1832 = vmatprep.subr.mxu0 0.0
        %1833 = vmatpush1.msra.mxu0 0.0
        %1834 = vmatprep.subr.mxu0 0.0
        %1835 = vmatpush1.msra.mxu0 0.0
        %1836 = vmatprep.subr.mxu0 0.0
        %1837 = vmatpush1.msra.mxu0 %v1799
        %1838 = vmatprep.subr.mxu0 0.0
        %1839 = vmatpush1.msra.mxu0 %v1797
        %1840 = vmatprep.subr.mxu0 0.0
        %1841 = vmatpush2.msra.mxu0 0.0
        %1842 = vmatprep.subr.mxu0 0.0
        %1843 = vmatpush2.msra.mxu0 0.0
        %1844 = vmatprep.subr.mxu0 0.0
        %1845 = vmatpush2.msra.mxu0 0.0
        %1846 = vmatprep.subr.mxu0 0.0
        %1847 = vmatpush2.msra.mxu0 0.0
        %1848 = vmatprep.subr.mxu0 0.0
        %1849 = vmatpush2.msra.mxu0 0.0
        %1850 = vmatprep.subr.mxu0 0.0
        %1851 = vmatpush2.msra.mxu0 0.0
        %1852 = vmatprep.subr.mxu0 0.0
        %1853 = vmatpush2.msra.mxu0 0.0
        %1854 = vmatprep.subr.mxu0 0.0
        %1855 = vmatpush2.msra.mxu0 0.0
        %1856 = vmatprep.subr.mxu0 0.0
        %1857 = vmatpush2.msra.mxu0 0.0
        %1858 = vmatprep.subr.mxu0 0.0
        %1859 = vmatpush2.msra.mxu0 0.0
        %1860 = vmatprep.subr.mxu0 0.0
        %1861 = vmatpush2.msra.mxu0 0.0
        %1862 = vmatprep.subr.mxu0 0.0
        %1863 = vmatpush2.msra.mxu0 0.0
        %1864 = vmatprep.subr.mxu0 0.0
        %1865 = vmatpush2.msra.mxu0 0.0
        %1866 = vmatprep.subr.mxu0 0.0
        %1867 = vmatpush2.msra.mxu0 0.0
        %1868 = vmatprep.subr.mxu0 0.0
        %1869 = vmatpush2.msra.mxu0 0.0
        %1870 = vmatprep.subr.mxu0 0.0
        %1871 = vmatpush2.msra.mxu0 0.0
        %1872 = vmatprep.mubr.f32.mxu0 0.0
        %1873 = vmatmul.mubr.f32.gmra.mxu0 %v1803
        %v1874 = vpop.f32.mrf.mxu0
        %v1875 = vadd.f32 0.0, %v1874
        %v1876 = vpop.f32.mrf.mxu0
        %1877 = vmatprep.mubr.f32.mxu0 0.0
        %1878 = vmatmul.mubr.f32.gmra.mxu0 %v1806
        %v1879 = vpop.f32.mrf.mxu0
        %v1880 = vadd.f32 0.0, %v1879
        %v1881 = vpop.f32.mrf.mxu0
        %1882 = vdwg.mxu0
        %v1883 = vld [vmem:[%s655 + $0x18] sm:$0xff]
        %v1885 = vsel %vm833, %v1875, 0
        %v1888 = vsel %vm833, %v1880, 0
        %1890 = vmatprep.subr.mxu0 0.0
        %1891 = vmatpush1.msra.mxu0 0.0
        %1892 = vmatprep.subr.mxu0 0.0
        %1893 = vmatpush1.msra.mxu0 0.0
        %1894 = vmatprep.subr.mxu0 0.0
        %1895 = vmatpush1.msra.mxu0 0.0
        %1896 = vmatprep.subr.mxu0 0.0
        %1897 = vmatpush1.msra.mxu0 0.0
        %1898 = vmatprep.subr.mxu0 0.0
        %1899 = vmatpush1.msra.mxu0 0.0
        %1900 = vmatprep.subr.mxu0 0.0
        %1901 = vmatpush1.msra.mxu0 0.0
        %1902 = vmatprep.subr.mxu0 0.0
        %1903 = vmatpush1.msra.mxu0 0.0
        %1904 = vmatprep.subr.mxu0 0.0
        %1905 = vmatpush1.msra.mxu0 0.0
        %1906 = vmatprep.subr.mxu0 0.0
        %1907 = vmatpush1.msra.mxu0 0.0
        %1908 = vmatprep.subr.mxu0 0.0
        %1909 = vmatpush1.msra.mxu0 0.0
        %1910 = vmatprep.subr.mxu0 0.0
        %1911 = vmatpush1.msra.mxu0 0.0
        %1912 = vmatprep.subr.mxu0 0.0
        %1913 = vmatpush1.msra.mxu0 0.0
        %1914 = vmatprep.subr.mxu0 0.0
        %1915 = vmatpush1.msra.mxu0 0.0
        %1916 = vmatprep.subr.mxu0 0.0
        %1917 = vmatpush1.msra.mxu0 0.0
        %1918 = vmatprep.subr.mxu0 0.0
        %1919 = vmatpush1.msra.mxu0 0.0
        %1920 = vmatprep.subr.mxu0 0.0
        %1921 = vmatpush1.msra.mxu0 %v1883
        %1922 = vmatprep.subr.mxu0 0.0
        %1923 = vmatpush2.msra.mxu0 0.0
        %1924 = vmatprep.subr.mxu0 0.0
        %1925 = vmatpush2.msra.mxu0 0.0
        %1926 = vmatprep.subr.mxu0 0.0
        %1927 = vmatpush2.msra.mxu0 0.0
        %1928 = vmatprep.subr.mxu0 0.0
        %1929 = vmatpush2.msra.mxu0 0.0
        %1930 = vmatprep.subr.mxu0 0.0
        %1931 = vmatpush2.msra.mxu0 0.0
        %1932 = vmatprep.subr.mxu0 0.0
        %1933 = vmatpush2.msra.mxu0 0.0
        %1934 = vmatprep.subr.mxu0 0.0
        %1935 = vmatpush2.msra.mxu0 0.0
        %1936 = vmatprep.subr.mxu0 0.0
        %1937 = vmatpush2.msra.mxu0 0.0
        %1938 = vmatprep.subr.mxu0 0.0
        %1939 = vmatpush2.msra.mxu0 0.0
        %1940 = vmatprep.subr.mxu0 0.0
        %1941 = vmatpush2.msra.mxu0 0.0
        %1942 = vmatprep.subr.mxu0 0.0
        %1943 = vmatpush2.msra.mxu0 0.0
        %1944 = vmatprep.subr.mxu0 0.0
        %1945 = vmatpush2.msra.mxu0 0.0
        %1946 = vmatprep.subr.mxu0 0.0
        %1947 = vmatpush2.msra.mxu0 0.0
        %1948 = vmatprep.subr.mxu0 0.0
        %1949 = vmatpush2.msra.mxu0 0.0
        %1950 = vmatprep.subr.mxu0 0.0
        %1951 = vmatpush2.msra.mxu0 0.0
        %1952 = vmatprep.subr.mxu0 0.0
        %1953 = vmatpush2.msra.mxu0 0.0
        %1954 = vmatprep.mubr.f32.mxu0 0.0
        %1955 = vmatmul.mubr.f32.gmra.mxu0 %v1885
        %v1956 = vpop.f32.mrf.mxu0
        %v1957 = vadd.f32 0.0, %v1956
        %v1958 = vpop.f32.mrf.mxu0
        %1959 = vmatprep.mubr.f32.mxu0 0.0
        %1960 = vmatmul.mubr.f32.gmra.mxu0 %v1888
        %v1961 = vpop.f32.mrf.mxu0
        %v1962 = vadd.f32 0.0, %v1961
        %v1963 = vpop.f32.mrf.mxu0
        %1964 = vdwg.mxu0
        %v1965 = vadd.f32 %v1679, %v1957
        %v1966 = vadd.f32 %v1680, %v1962
        %v1967 = vld [vmem:[%s658] sm:$0x1]
        %v1969 = vlaneseq
        %v1970 = vshrl.u32 %v1969, 7
        %v1971 = vsub.s32 0, %v1970
        %v1972 = vrot.slane %v1967, %v1971
        %v1974 = vadd.f32 %v1965, %v1972
        %v1975 = vadd.f32 %v1966, %v1972
        %v1976 = vadd.f32 %v694, %v1974
        %v1977 = vadd.f32 %v695, %v1975
        %v1978 = vld [vmem:[%s661] sm:$0x1]
        %v1979 = vld [vmem:[%s664] sm:$0x1]
        %v1980 = vsel %vm698, %v1976, 0.0
        %1981 = vadd.xlane.f32.xlu0 %v1980
        %v1982 = vpop.xlane.xlu0 %1981
        %v1983 = vsel %vm698, %v1977, 0.0
        %1984 = vadd.xlane.f32.xlu0 %v1983
        %v1985 = vpop.xlane.xlu0 %1984
        %v1986 = vmul.f32 %v1982, %v705
        %v1987 = vmul.f32 %v1985, %v705
        %v1988 = vsub.f32 %v1976, %v1986
        %v1989 = vsub.f32 %v1977, %v1987
        %v1990 = vmul.f32 %v1988, %v1988
        %v1991 = vmul.f32 %v1989, %v1989
        %v1992 = vsel %vm698, %v1990, 0.0
        %1993 = vadd.xlane.f32.xlu0 %v1992
        %v1994 = vpop.xlane.xlu0 %1993
        %v1995 = vsel %vm698, %v1991, 0.0
        %1996 = vadd.xlane.f32.xlu0 %v1995
        %v1997 = vpop.xlane.xlu0 %1996
        %v1998 = vmul.f32 %v1994, %v705
        %v1999 = vmul.f32 %v1997, %v705
        %v2000 = vadd.f32 %v1998, 1e-05
        %v2001 = vadd.f32 %v1999, 1e-05
        %v2002 = vrsqrt.pop %v2000
        %v2003 = vrsqrt.pop %v2001
        %v2004 = vmul.f32 %v1988, %v2002
        %v2005 = vmul.f32 %v1989, %v2003
        %v2007 = vlaneseq
        %v2008 = vshrl.u32 %v2007, 7
        %v2009 = vsub.s32 0, %v2008
        %v2010 = vrot.slane %v1978, %v2009
        %v2012 = vmul.f32 %v2004, %v2010
        %v2013 = vmul.f32 %v2005, %v2010
        %v2015 = vlaneseq
        %v2016 = vshrl.u32 %v2015, 7
        %v2017 = vsub.s32 0, %v2016
        %v2018 = vrot.slane %v1979, %v2017
        %v2020 = vadd.f32 %v2012, %v2018
        %v2021 = vadd.f32 %v2013, %v2018
        %v2022 = vld [vmem:[%s669] sm:$0xff]
        %v2023 = vld [vmem:[%s669 + $0x8] sm:$0xff]
        %v2024 = vld [vmem:[%s669 + $0x10] sm:$0xff]
        %v2025 = vld [vmem:[%s669 + $0x18] sm:$0xff]
        %v2026 = vld [vmem:[%s672] sm:$0x1]
        %v2028 = vlaneseq
        %v2029 = vshrl.u32 %v2028, 7
        %v2030 = vsub.s32 0, %v2029
        %v2031 = vrot.slane %v2026, %v2030
        %v2034 = vsel %vm698, %v2020, 0
        %v2037 = vsel %vm698, %v2021, 0
        %2039 = vmatprep.subr.mxu0 0.0
        %2040 = vmatpush1.msra.mxu0 0.0
        %2041 = vmatprep.subr.mxu0 0.0
        %2042 = vmatpush1.msra.mxu0 0.0
        %2043 = vmatprep.subr.mxu0 0.0
        %2044 = vmatpush1.msra.mxu0 0.0
        %2045 = vmatprep.subr.mxu0 0.0
        %2046 = vmatpush1.msra.mxu0 0.0
        %2047 = vmatprep.subr.mxu0 0.0
        %2048 = vmatpush1.msra.mxu0 0.0
        %2049 = vmatprep.subr.mxu0 0.0
        %2050 = vmatpush1.msra.mxu0 0.0
        %2051 = vmatprep.subr.mxu0 0.0
        %2052 = vmatpush1.msra.mxu0 0.0
        %2053 = vmatprep.subr.mxu0 0.0
        %2054 = vmatpush1.msra.mxu0 0.0
        %2055 = vmatprep.subr.mxu0 0.0
        %2056 = vmatpush1.msra.mxu0 0.0
        %2057 = vmatprep.subr.mxu0 0.0
        %2058 = vmatpush1.msra.mxu0 0.0
        %2059 = vmatprep.subr.mxu0 0.0
        %2060 = vmatpush1.msra.mxu0 0.0
        %2061 = vmatprep.subr.mxu0 0.0
        %2062 = vmatpush1.msra.mxu0 0.0
        %2063 = vmatprep.subr.mxu0 0.0
        %2064 = vmatpush1.msra.mxu0 %v2025
        %2065 = vmatprep.subr.mxu0 0.0
        %2066 = vmatpush1.msra.mxu0 %v2024
        %2067 = vmatprep.subr.mxu0 0.0
        %2068 = vmatpush1.msra.mxu0 %v2023
        %2069 = vmatprep.subr.mxu0 0.0
        %2070 = vmatpush1.msra.mxu0 %v2022
        %2071 = vmatprep.subr.mxu0 0.0
        %2072 = vmatpush2.msra.mxu0 0.0
        %2073 = vmatprep.subr.mxu0 0.0
        %2074 = vmatpush2.msra.mxu0 0.0
        %2075 = vmatprep.subr.mxu0 0.0
        %2076 = vmatpush2.msra.mxu0 0.0
        %2077 = vmatprep.subr.mxu0 0.0
        %2078 = vmatpush2.msra.mxu0 0.0
        %2079 = vmatprep.subr.mxu0 0.0
        %2080 = vmatpush2.msra.mxu0 0.0
        %2081 = vmatprep.subr.mxu0 0.0
        %2082 = vmatpush2.msra.mxu0 0.0
        %2083 = vmatprep.subr.mxu0 0.0
        %2084 = vmatpush2.msra.mxu0 0.0
        %2085 = vmatprep.subr.mxu0 0.0
        %2086 = vmatpush2.msra.mxu0 0.0
        %2087 = vmatprep.subr.mxu0 0.0
        %2088 = vmatpush2.msra.mxu0 0.0
        %2089 = vmatprep.subr.mxu0 0.0
        %2090 = vmatpush2.msra.mxu0 0.0
        %2091 = vmatprep.subr.mxu0 0.0
        %2092 = vmatpush2.msra.mxu0 0.0
        %2093 = vmatprep.subr.mxu0 0.0
        %2094 = vmatpush2.msra.mxu0 0.0
        %2095 = vmatprep.subr.mxu0 0.0
        %2096 = vmatpush2.msra.mxu0 0.0
        %2097 = vmatprep.subr.mxu0 0.0
        %2098 = vmatpush2.msra.mxu0 0.0
        %2099 = vmatprep.subr.mxu0 0.0
        %2100 = vmatpush2.msra.mxu0 0.0
        %2101 = vmatprep.subr.mxu0 0.0
        %2102 = vmatpush2.msra.mxu0 0.0
        %2103 = vmatprep.mubr.f32.mxu0 0.0
        %2104 = vmatmul.mubr.f32.gmra.mxu0 %v2034
        %v2105 = vpop.f32.mrf.mxu0
        %v2106 = vadd.f32 %v2031, %v2105
        %v2107 = vpop.f32.mrf.mxu0
        %2108 = vmatprep.mubr.f32.mxu0 0.0
        %2109 = vmatmul.mubr.f32.gmra.mxu0 %v2037
        %v2110 = vpop.f32.mrf.mxu0
        %v2111 = vadd.f32 %v2031, %v2110
        %v2112 = vpop.f32.mrf.mxu0
        %2113 = vdwg.mxu0
        %v2114 = vmul.f32 %v2106, 0.5
        %v2115 = vmul.f32 %v2111, 0.5
        %v2116 = vmul.f32 %v2106, 0.044715
        %v2117 = vmul.f32 %v2111, 0.044715
        %v2118 = vmul.f32 %v2116, %v2106
        %v2119 = vmul.f32 %v2117, %v2111
        %v2120 = vmul.f32 %v2118, %v2106
        %v2121 = vmul.f32 %v2119, %v2111
        %v2122 = vadd.f32 %v2106, %v2120
        %v2123 = vadd.f32 %v2111, %v2121
        %v2124 = vmul.f32 %v2122, 0.7978846
        %v2125 = vmul.f32 %v2123, 0.7978846
        %v2126 = vtanh.pop %v2124
        %v2127 = vtanh.pop %v2125
        %v2128 = vadd.f32 %v2126, 1.0
        %v2129 = vadd.f32 %v2127, 1.0
        %v2130 = vmul.f32 %v2114, %v2128
        %v2131 = vmul.f32 %v2115, %v2129
        %v2132 = vld [vmem:[%s677] sm:$0xff]
        %v2133 = vld [vmem:[%s677 + $0x8] sm:$0xff]
        %v2134 = vld [vmem:[%s677 + $0x10] sm:$0xff]
        %v2135 = vld [vmem:[%s677 + $0x18] sm:$0xff]
        %v2136 = vld [vmem:[%s677 + $0x20] sm:$0xff]
        %v2137 = vld [vmem:[%s677 + $0x28] sm:$0xff]
        %v2138 = vld [vmem:[%s677 + $0x30] sm:$0xff]
        %v2139 = vld [vmem:[%s677 + $0x38] sm:$0xff]
        %v2140 = vld [vmem:[%s680] sm:$0x1]
        %v2142 = vlaneseq
        %v2143 = vshrl.u32 %v2142, 7
        %v2144 = vsub.s32 0, %v2143
        %v2145 = vrot.slane %v2140, %v2144
        %vm2147 = vcmask 523264
        %v2149 = vsel %vm2147, %v2130, 0
        %v2152 = vsel %vm2147, %v2131, 0
        %2154 = vmatprep.subr.mxu0 0.0
        %2155 = vmatpush1.msra.mxu0 0.0
        %2156 = vmatprep.subr.mxu0 0.0
        %2157 = vmatpush1.msra.mxu0 0.0
        %2158 = vmatprep.subr.mxu0 0.0
        %2159 = vmatpush1.msra.mxu0 0.0
        %2160 = vmatprep.subr.mxu0 0.0
        %2161 = vmatpush1.msra.mxu0 0.0
        %2162 = vmatprep.subr.mxu0 0.0
        %2163 = vmatpush1.msra.mxu0 0.0
        %2164 = vmatprep.subr.mxu0 0.0
        %2165 = vmatpush1.msra.mxu0 0.0
        %2166 = vmatprep.subr.mxu0 0.0
        %2167 = vmatpush1.msra.mxu0 0.0
        %2168 = vmatprep.subr.mxu0 0.0
        %2169 = vmatpush1.msra.mxu0 0.0
        %2170 = vmatprep.subr.mxu0 0.0
        %2171 = vmatpush1.msra.mxu0 %v2139
        %2172 = vmatprep.subr.mxu0 0.0
        %2173 = vmatpush1.msra.mxu0 %v2138
        %2174 = vmatprep.subr.mxu0 0.0
        %2175 = vmatpush1.msra.mxu0 %v2137
        %2176 = vmatprep.subr.mxu0 0.0
        %2177 = vmatpush1.msra.mxu0 %v2136
        %2178 = vmatprep.subr.mxu0 0.0
        %2179 = vmatpush1.msra.mxu0 %v2135
        %2180 = vmatprep.subr.mxu0 0.0
        %2181 = vmatpush1.msra.mxu0 %v2134
        %2182 = vmatprep.subr.mxu0 0.0
        %2183 = vmatpush1.msra.mxu0 %v2133
        %2184 = vmatprep.subr.mxu0 0.0
        %2185 = vmatpush1.msra.mxu0 %v2132
        %2186 = vmatprep.subr.mxu0 0.0
        %2187 = vmatpush2.msra.mxu0 0.0
        %2188 = vmatprep.subr.mxu0 0.0
        %2189 = vmatpush2.msra.mxu0 0.0
        %2190 = vmatprep.subr.mxu0 0.0
        %2191 = vmatpush2.msra.mxu0 0.0
        %2192 = vmatprep.subr.mxu0 0.0
        %2193 = vmatpush2.msra.mxu0 0.0
        %2194 = vmatprep.subr.mxu0 0.0
        %2195 = vmatpush2.msra.mxu0 0.0
        %2196 = vmatprep.subr.mxu0 0.0
        %2197 = vmatpush2.msra.mxu0 0.0
        %2198 = vmatprep.subr.mxu0 0.0
        %2199 = vmatpush2.msra.mxu0 0.0
        %2200 = vmatprep.subr.mxu0 0.0
        %2201 = vmatpush2.msra.mxu0 0.0
        %2202 = vmatprep.subr.mxu0 0.0
        %2203 = vmatpush2.msra.mxu0 0.0
        %2204 = vmatprep.subr.mxu0 0.0
        %2205 = vmatpush2.msra.mxu0 0.0
        %2206 = vmatprep.subr.mxu0 0.0
        %2207 = vmatpush2.msra.mxu0 0.0
        %2208 = vmatprep.subr.mxu0 0.0
        %2209 = vmatpush2.msra.mxu0 0.0
        %2210 = vmatprep.subr.mxu0 0.0
        %2211 = vmatpush2.msra.mxu0 0.0
        %2212 = vmatprep.subr.mxu0 0.0
        %2213 = vmatpush2.msra.mxu0 0.0
        %2214 = vmatprep.subr.mxu0 0.0
        %2215 = vmatpush2.msra.mxu0 0.0
        %2216 = vmatprep.subr.mxu0 0.0
        %2217 = vmatpush2.msra.mxu0 0.0
        %2218 = vmatprep.mubr.f32.mxu0 0.0
        %2219 = vmatmul.mubr.f32.gmra.mxu0 %v2149
        %v2220 = vpop.f32.mrf.mxu0
        %v2221 = vadd.f32 %v2145, %v2220
        %v2222 = vpop.f32.mrf.mxu0
        %2223 = vmatprep.mubr.f32.mxu0 0.0
        %2224 = vmatmul.mubr.f32.gmra.mxu0 %v2152
        %v2225 = vpop.f32.mrf.mxu0
        %v2226 = vadd.f32 %v2145, %v2225
        %v2227 = vpop.f32.mrf.mxu0
        %2228 = vdwg.mxu0
        %v2229 = vadd.f32 %v1976, %v2221
        %v2230 = vadd.f32 %v1977, %v2226
        %2231 = vst.msk [vmem:[#allocation2] sm:$0xff] %vm698, %v2229
        %2232 = vst.msk [vmem:[#allocation2 + $0x8] sm:$0xff] %vm698, %v2230
        %p2233 = scmp.eq.s32.totalorder %s36, 1
        // Predicated region
        $region89: #{tpu_custom_call.1} parent=71 // pred_check
          %p2234 = pneg %p2233
        $region90: #{tpu_custom_call.1} parent=71 // pred_check_branch
          %2236 = sbr.rel (%p2234) target = $region92
        $region91: #{tpu_custom_call.1} parent=71 // pred_region
          %v2237 = vld [vmem:[#allocation2] sm:$0xff]
          %v2238 = vld [vmem:[#allocation2 + $0x8] sm:$0xff]
          %2239 = vst.msk [vmem:[%s642] sm:$0xff] %vm698, %v2237
          %2240 = vst.msk [vmem:[%s642 + $0x8] sm:$0xff] %vm698, %v2238
        $region92: #{tpu_custom_call.1} parent=71 // pred_fallthru
          _
        %s2241 = sand.u32 %s384, 1
        %s2242 = scalar_lea.sflag [#allocation5], %s2241
        %s2243 = sand.u32 %s384, 1
        %s2244 = smul.addr %s2243, 16
        %s2245 = scalar_lea.vmem [#allocation9], %s2244
        // Predicated region
        $region93: #{tpu_custom_call.1} parent=71 // pred_check
          %p2246 = pneg %p394
        $region94: #{tpu_custom_call.1} parent=71 // pred_check_branch
          %2248 = sbr.rel (%p2246) target = $region96
        $region95: #{tpu_custom_call.1} parent=71 // pred_region
          %s2250 = ssub.s32 256, 256
          %2251 = vsyncadd %s2242, %s2250
          %s2252 = smul.addr %s35, 2
          %s2253 = smul.addr %s2252, 128
          %s2254 = scalar_lea.hbm %s13, %s2253
          %s2255 = sshll.u32 %s2245, 4
          %s2256 = int_to_ptr.vmem [resolvable:$true] %s2255
          %2261 = dma.vmem_to_hbm [thread:$0]  %s2256, 256, %s2254, %s2242, 128, 128, 8
        $region96: #{tpu_custom_call.1} parent=71 // pred_fallthru
          _
      $region72: #{tpu_custom_call.1} parent=5 // pred_fallthru
        _
      %p2262 = scmp.le.s32.totalorder 2, %s26
      // Predicated region
      $region97: #{tpu_custom_call.1} parent=5 // pred_check
        %p2263 = pneg %p2262
      $region98: #{tpu_custom_call.1} parent=5 // pred_check_branch
        %2265 = sbr.rel (%p2263) target = $region100
      $region99: #{tpu_custom_call.1} parent=5 // pred_region
        %s2266 = ssub.s32 %s26, 2
        // Predicated region
        $region101: #{tpu_custom_call.1} parent=99 // pred_check
          %p2267 = pneg %p400
        $region102: #{tpu_custom_call.1} parent=99 // pred_check_branch
          %2269 = sbr.rel (%p2267) target = $region104
        $region103: #{tpu_custom_call.1} parent=99 // pred_region
          %s2270 = sand.u32 %s385, 1
          %s2271 = scalar_lea.sflag [#allocation5], %s2270
          %s2272 = sand.u32 %s385, 1
          %s2273 = smul.addr %s2272, 16
          %s2274 = scalar_lea.vmem [#allocation9], %s2273
          %2275 = dma.done %s2271, 256
        $region104: #{tpu_custom_call.1} parent=99 // pred_fallthru
          _
      $region100: #{tpu_custom_call.1} parent=5 // pred_fallthru
        _
    $region6: #{tpu_custom_call.1} parent=1 // loop_footer
      %s30 = sadd.s32 1, %s26
    $region7: #{tpu_custom_call.1} parent=1 // loop_footer_branch
      %25 = sbr.rel target = $region3
    $region8: #{tpu_custom_call.1} parent=1 // loop_exit
      _
    %2276 = vsyncpa [#allocation4], 1
    %s2277 = scalar_lea.sflag [#allocation4], 1
    %2278 = vsyncpa %s2277, 1
    %2279 = vsyncpa [#allocation7], 1
    %2280 = vsyncpa [#allocation5], 1
    %s2281 = scalar_lea.sflag [#allocation5], 1
    %2282 = vsyncpa %s2281, 1

</llo_original>
